<compile_context>
chip_gen: v6e
topology: v6e:2x2x1
jax: 0.10.0
libtpu: 0.0.40
codegen_flags: <defaults>
</compile_context>

<pallas_src>
import functools

import jax
import jax.numpy as jnp
from jax import lax
from jax.experimental import pallas as pl
from jax.experimental.pallas import tpu as pltpu


def _is_pow2(v):
    return v > 0 and (v & (v - 1)) == 0


def _llskm_1d_kernel(x_ref, w1k_ref, b1_ref, w2k_ref, b2_ref, wsum_ref, wc_ref,
                     w1a_ref, b1a_ref, w2a_ref, b2a_ref, out_ref,
                     *, ksize, width, height, hw, nbatch):
    """LLSKM_1D forward over the whole batch in one shot.

    x_ref    : (C, L) bf16   L = N*H*W, channels on sublanes, pixels on lanes
    w1k_ref  : (k, C, C) bf16  conv_1xn taps   [dx, out, in]
    b1_ref   : (C, 1) f32      conv_1xn bias
    w2k_ref  : (k, C, C) bf16  conv_nx1 taps   [dy, out, in]
    b2_ref   : (C, 1) f32      conv_nx1 bias
    wsum_ref : (C, C) bf16     nxn_kernel summed over taps   (center conv weight)
    wc_ref   : (C, C) bf16     nxn_kernel center tap         (offset conv weight)
    w1a/b1a  : (Cr, C), (Cr, 1) f32  attention fc1 (BN folded)
    w2a/b2a  : (C, Cr), (C, 1)  f32  attention fc2 (BN folded)
    out_ref  : (C, L) f32
    """
    C, L = out_ref.shape
    pad = ksize // 2
    f32 = jnp.float32
    dot = lambda a, b: jnp.dot(a, b, preferred_element_type=f32)

    xb = x_ref[...]                          # (C, L) bf16 (MXU operand)
    xf = xb.astype(f32)                      # f32 copy: roll source + GAP (selects stay f32)

    # lane -> (batch, row, col) decomposition, built in-kernel (no index-DMA input).
    lane = lax.broadcasted_iota(jnp.int32, (1, L), 1)
    if _is_pow2(width) and _is_pow2(hw):
        col = lane & (width - 1)                               # width divides hw
        row = (lane & (hw - 1)) >> (width.bit_length() - 1)
        bidx = lane >> (hw.bit_length() - 1)
    else:
        # TODO(synk): vector int div/rem path; prefer power-of-two H/W on TPU.
        col = lane % width
        row = (lane % hw) // width
        bidx = lane // hw

    # ---- out_1xn = conv_1xn(x): k lane-rolled taps, masks applied to the f32 result ----
    acc1 = dot(w1k_ref[pad], xb)                               # center tap, no mask
    for dx in range(ksize):
        s = dx - pad
        if s == 0:
            continue
        sh = pltpu.roll(xf, shift=(-s) % L, axis=1).astype(jnp.bfloat16)   # sh[l] = x[l+s]
        part = dot(w1k_ref[dx], sh)                                        # (C, L) f32
        valid = (col < width - s) if s > 0 else (col >= -s)                # same-row taps only
        acc1 = acc1 + jnp.where(valid, part, 0.0)
    out_1xn = acc1 + b1_ref[...]                                           # (C, L) f32

    # ---- out_nx1_normal = conv_nx1(out_1xn): vertical taps == lane rolls by +-W ----
    acc2 = dot(w2k_ref[pad], out_1xn.astype(jnp.bfloat16))
    for dy in range(ksize):
        s = dy - pad
        if s == 0:
            continue
        sh = pltpu.roll(out_1xn, shift=(-s * width) % L, axis=1).astype(jnp.bfloat16)
        part = dot(w2k_ref[dy], sh)                                        # (C, L) f32
        valid = (row < height - s) if s > 0 else (row >= -s)               # same-image rows only
        acc2 = acc2 + jnp.where(valid, part, 0.0)
    out_nx1 = acc2 + b2_ref[...]                                           # (C, L) f32

    # ---- theta-independent center / offset 1x1 convs (un-fused from the attention) ----
    out_center = dot(wsum_ref[...], xb)                                    # (C, L) f32
    out_offset = dot(wc_ref[...], xb)                                      # (C, L) f32

    # ---- Avg_ChannelAttention per image: GAP -> fc1(+BN) -> ReLU -> fc2(+BN) -> Sigmoid ----
    theta_b = jnp.zeros((C, L), f32)
    for n in range(nbatch):
        seg = bidx == n                                                    # (1, L)
        pooled = jnp.sum(jnp.where(seg, xf, 0.0), axis=1, keepdims=True) * (1.0 / hw)
        h1 = jnp.maximum(dot(w1a_ref[...], pooled) + b1a_ref[...], 0.0)    # (Cr, 1)
        theta = jax.nn.sigmoid(dot(w2a_ref[...], h1) + b2a_ref[...])       # (C, 1)
        theta_b = theta_b + jnp.where(seg, theta, 0.0)                     # segmented broadcast

    out_ref[...] = (out_center - out_nx1 + theta_b * out_offset).astype(out_ref.dtype)


def llskm_1d_forward(x_nchw, params, ksize=3, eps=1e-5):
    """LLSKM_1D forward. x_nchw: (N, C, H, W) f32 -> (N, C, H, W) f32."""
    N, C, H, W = x_nchw.shape
    HW = H * W
    L = N * HW
    pad = ksize // 2
    Cr = params["fc1_w"].shape[0]

    w1 = params["w_1xn"].astype(jnp.float32)        # (C, C, 1, k)
    w2 = params["w_nx1"].astype(jnp.float32)        # (C, C, k, 1)
    b1 = params["b_1xn"].astype(jnp.float32).reshape(C, 1)
    b2 = params["b_nx1"].astype(jnp.float32).reshape(C, 1)

    # tap-major conv weights for the MXU: [tap, out_channel, in_channel], bf16
    w1k = jnp.transpose(w1[:, :, 0, :], (2, 0, 1)).astype(jnp.bfloat16)    # (k, C, C)
    w2k = jnp.transpose(w2[:, :, :, 0], (2, 0, 1)).astype(jnp.bfloat16)    # (k, C, C)

    # nxn_kernel[o,i,a,b] = w_1xn[o,i,0,a] * w_nx1[o,i,b,0]  (separable outer product)
    wsum = (w1[:, :, 0, :].sum(-1) * w2[:, :, :, 0].sum(-1)).astype(jnp.bfloat16)   # (C, C)
    wc = (w1[:, :, 0, pad] * w2[:, :, pad, 0]).astype(jnp.bfloat16)                 # (C, C)

    # fold the BatchNorms of Avg_ChannelAttention (inference mode) into the 1x1 convs
    s1 = params["bn1_gamma"] / jnp.sqrt(params["bn1_var"] + eps)
    w1a = (params["fc1_w"].reshape(Cr, C) * s1[:, None]).astype(jnp.float32)
    b1a = (params["bn1_beta"] - params["bn1_mean"] * s1).reshape(Cr, 1).astype(jnp.float32)
    s2 = params["bn2_gamma"] / jnp.sqrt(params["bn2_var"] + eps)
    w2a = (params["fc2_w"].reshape(C, Cr) * s2[:, None]).astype(jnp.float32)
    b2a = (params["bn2_beta"] - params["bn2_mean"] * s2).reshape(C, 1).astype(jnp.float32)

    # channels on sublanes, every pixel of the whole batch on lanes (lane-dense, bf16)
    xb = jnp.transpose(x_nchw.reshape(N, C, HW), (1, 0, 2)).reshape(C, L).astype(jnp.bfloat16)

    kern = functools.partial(_llskm_1d_kernel, ksize=ksize, width=W, height=H,
                             hw=HW, nbatch=N)
    out_cl = pl.pallas_call(
        kern,
        out_shape=jax.ShapeDtypeStruct((C, L), jnp.float32),
        grid_spec=pltpu.PrefetchScalarGridSpec(
            num_scalar_prefetch=0,
            grid=(1,),                                            # whole batch in one step
            in_specs=[
                pl.BlockSpec((C, L), lambda i: (0, 0)),           # x (bf16)
                pl.BlockSpec((ksize, C, C), lambda i: (0, 0, 0)), # w1k
                pl.BlockSpec((C, 1), lambda i: (0, 0)),           # b1
                pl.BlockSpec((ksize, C, C), lambda i: (0, 0, 0)), # w2k
                pl.BlockSpec((C, 1), lambda i: (0, 0)),           # b2
                pl.BlockSpec((C, C), lambda i: (0, 0)),           # wsum
                pl.BlockSpec((C, C), lambda i: (0, 0)),           # wc
                pl.BlockSpec((Cr, C), lambda i: (0, 0)),          # w1a
                pl.BlockSpec((Cr, 1), lambda i: (0, 0)),          # b1a
                pl.BlockSpec((C, Cr), lambda i: (0, 0)),          # w2a
                pl.BlockSpec((C, 1), lambda i: (0, 0)),           # b2a
            ],
            out_specs=pl.BlockSpec((C, L), lambda i: (0, 0)),
        ),
        compiler_params=pltpu.CompilerParams(
            dimension_semantics=("arbitrary",),
        ),
    )(xb, w1k, b1, w2k, b2, wsum, wc, w1a, b1a, w2a, b2a)

    # back to NCHW (f32, matching the PyTorch module's output dtype)
    return jnp.transpose(out_cl.reshape(C, N, HW), (1, 0, 2)).reshape(N, C, H, W)


def llskm_1d_reference(x, params, ksize=3, eps=1e-5):
    """Pure-JAX f32 reference (NCHW, un-fused BN) mirroring the PyTorch forward."""
    pad = ksize // 2
    C = x.shape[1]
    Cr = params["fc1_w"].shape[0]
    w1 = params["w_1xn"].astype(jnp.float32)
    w2 = params["w_nx1"].astype(jnp.float32)
    dn = ("NCHW", "OIHW", "NCHW")

    out_1xn = lax.conv_general_dilated(x, w1, (1, 1), ((0, 0), (pad, pad)),
                                       dimension_numbers=dn) \
        + params["b_1xn"][None, :, None, None]
    out_nx1 = lax.conv_general_dilated(out_1xn, w2, (1, 1), ((pad, pad), (0, 0)),
                                       dimension_numbers=dn) \
        + params["b_nx1"][None, :, None, None]

    nxn = w1[:, :, 0, :, None] * w2[:, :, None, :, 0]            # (O, I, k, k)
    wsum = nxn.sum((2, 3))
    wc = nxn[:, :, pad, pad]
    out_center = jnp.einsum("oi,nihw->nohw", wsum, x)
    out_offset = jnp.einsum("oi,nihw->nohw", wc, x)

    pooled = x.mean((2, 3))                                      # (N, C)
    h = pooled @ params["fc1_w"].reshape(Cr, C).T
    h = ((h - params["bn1_mean"]) / jnp.sqrt(params["bn1_var"] + eps)
         * params["bn1_gamma"] + params["bn1_beta"])
    h = jax.nn.relu(h)
    t = h @ params["fc2_w"].reshape(C, Cr).T
    t = ((t - params["bn2_mean"]) / jnp.sqrt(params["bn2_var"] + eps)
         * params["bn2_gamma"] + params["bn2_beta"])
    theta = jax.nn.sigmoid(t)[:, :, None, None]
    return out_center - out_nx1 + theta * out_offset


if __name__ == "__main__":
    N, C, H, W, r, k = 2, 4, 16, 16, 4, 3
    Cr = max(C // r, 1)
    key = jax.random.PRNGKey(0)
    ks = jax.random.split(key, 12)
    params = {
        "w_1xn": 0.2 * jax.random.normal(ks[0], (C, C, 1, k), jnp.float32),
        "b_1xn": 0.1 * jax.random.normal(ks[1], (C,), jnp.float32),
        "w_nx1": 0.2 * jax.random.normal(ks[2], (C, C, k, 1), jnp.float32),
        "b_nx1": 0.1 * jax.random.normal(ks[3], (C,), jnp.float32),
        "fc1_w": jax.random.normal(ks[4], (Cr, C, 1, 1), jnp.float32) / C ** 0.5,
        "fc2_w": jax.random.normal(ks[5], (C, Cr, 1, 1), jnp.float32) / Cr ** 0.5,
        "bn1_gamma": 1.0 + 0.1 * jax.random.normal(ks[6], (Cr,), jnp.float32),
        "bn1_beta": 0.1 * jax.random.normal(ks[7], (Cr,), jnp.float32),
        "bn1_mean": 0.1 * jax.random.normal(ks[8], (Cr,), jnp.float32),
        "bn1_var": jnp.abs(1.0 + 0.1 * jax.random.normal(ks[9], (Cr,), jnp.float32)),
        "bn2_gamma": 1.0 + 0.1 * jax.random.normal(ks[10], (C,), jnp.float32),
        "bn2_beta": jnp.zeros((C,), jnp.float32),
        "bn2_mean": jnp.zeros((C,), jnp.float32),
        "bn2_var": jnp.ones((C,), jnp.float32),
    }
    x = jax.random.normal(ks[11], (N, C, H, W), jnp.float32)

    out = llskm_1d_forward(x, params)
    out = jax.block_until_ready(out)

    ref = llskm_1d_reference(x, params)
    max_err = float(jnp.max(jnp.abs(out - ref)))
    ref_scale = float(jnp.max(jnp.abs(ref)))
    tol = 2e-2 * max(ref_scale, 1.0) + 2e-2   # bf16 activations/weights on the MXU paths
    assert out.shape == (N, C, H, W), out.shape
    assert max_err < tol, f"max abs err {max_err} (tol {tol})"
    print("KERNEL_OK")
</pallas_src>

<mosaic_0001>
module attributes {stable_mosaic.version = 11 : i64} {
  func.func @_llskm_1d_kernel(%arg0: i32, %arg1: memref<4x512xbf16, #tpu.memory_space<vmem>>, %arg2: memref<3x4x4xbf16, #tpu.memory_space<vmem>>, %arg3: memref<4x1xf32, #tpu.memory_space<vmem>>, %arg4: memref<3x4x4xbf16, #tpu.memory_space<vmem>>, %arg5: memref<4x1xf32, #tpu.memory_space<vmem>>, %arg6: memref<4x4xbf16, #tpu.memory_space<vmem>>, %arg7: memref<4x4xbf16, #tpu.memory_space<vmem>>, %arg8: memref<1x4xf32, #tpu.memory_space<vmem>>, %arg9: memref<1x1xf32, #tpu.memory_space<vmem>>, %arg10: memref<4x1xf32, #tpu.memory_space<vmem>>, %arg11: memref<4x1xf32, #tpu.memory_space<vmem>>, %arg12: memref<4x512xf32, #tpu.memory_space<vmem>>) attributes {dimension_semantics = [#tpu.dimension_semantics<arbitrary>], iteration_bounds = array<i64: 1>, scalar_prefetch = 0 : i64, scratch_operands = 0 : i64, tpu.core_type = #tpu.core_type<tc>, window_params = [{pipeline_mode = #tpu.pipeline_mode<synchronous>, transform_indices = @transform_0, window_bounds = array<i64: 4, 512>}, {pipeline_mode = #tpu.pipeline_mode<synchronous>, transform_indices = @transform_1, window_bounds = array<i64: 3, 4, 4>}, {pipeline_mode = #tpu.pipeline_mode<synchronous>, transform_indices = @transform_2, window_bounds = array<i64: 4, 1>}, {pipeline_mode = #tpu.pipeline_mode<synchronous>, transform_indices = @transform_3, window_bounds = array<i64: 3, 4, 4>}, {pipeline_mode = #tpu.pipeline_mode<synchronous>, transform_indices = @transform_4, window_bounds = array<i64: 4, 1>}, {pipeline_mode = #tpu.pipeline_mode<synchronous>, transform_indices = @transform_5, window_bounds = array<i64: 4, 4>}, {pipeline_mode = #tpu.pipeline_mode<synchronous>, transform_indices = @transform_6, window_bounds = array<i64: 4, 4>}, {pipeline_mode = #tpu.pipeline_mode<synchronous>, transform_indices = @transform_7, window_bounds = array<i64: 1, 4>}, {pipeline_mode = #tpu.pipeline_mode<synchronous>, transform_indices = @transform_8, window_bounds = array<i64: 1, 1>}, {pipeline_mode = #tpu.pipeline_mode<synchronous>, transform_indices = @transform_9, window_bounds = array<i64: 4, 1>}, {pipeline_mode = #tpu.pipeline_mode<synchronous>, transform_indices = @transform_10, window_bounds = array<i64: 4, 1>}, {pipeline_mode = #tpu.pipeline_mode<synchronous>, transform_indices = @transform_11, window_bounds = array<i64: 4, 512>}]} {
    %c0 = arith.constant 0 : index
    %c0_0 = arith.constant 0 : index
    %0 = vector.load %arg1[%c0, %c0_0] : memref<4x512xbf16, #tpu.memory_space<vmem>>, vector<4x512xbf16>
    %1 = arith.extf %0 : vector<4x512xbf16> to vector<4x512xf32>
    %2 = tpu.iota {dimensions = array<i32: 1>} : vector<1x512xi32>
    %c15_i32 = arith.constant 15 : i32
    %3 = vector.broadcast %c15_i32 : i32 to vector<1x512xi32>
    %4 = arith.andi %2, %3 : vector<1x512xi32>
    %c255_i32 = arith.constant 255 : i32
    %5 = vector.broadcast %c255_i32 : i32 to vector<1x512xi32>
    %6 = arith.andi %2, %5 : vector<1x512xi32>
    %c4_i32 = arith.constant 4 : i32
    %7 = vector.broadcast %c4_i32 : i32 to vector<1x512xi32>
    %8 = arith.shrsi %6, %7 : vector<1x512xi32>
    %c8_i32 = arith.constant 8 : i32
    %9 = vector.broadcast %c8_i32 : i32 to vector<1x512xi32>
    %10 = arith.shrsi %2, %9 : vector<1x512xi32>
    %c1 = arith.constant 1 : index
    %c0_1 = arith.constant 0 : index
    %c0_2 = arith.constant 0 : index
    %11 = vector.load %arg2[%c1, %c0_1, %c0_2] : memref<3x4x4xbf16, #tpu.memory_space<vmem>>, vector<1x4x4xbf16>
    %12 = vector.shape_cast %11 : vector<1x4x4xbf16> to vector<4x4xbf16>
    %cst = arith.constant dense<0.000000e+00> : vector<4x512xf32>
    %13 = tpu.matmul %12, %0, %cst {dimension_numbers = #tpu.dot_dimension_numbers<[1], [0], [0], [1], [0, 0, 1, 1], [], []>} : vector<4x4xbf16>, vector<4x512xbf16>, vector<4x512xf32> -> vector<4x512xf32>
    %c1_i32 = arith.constant 1 : i32
    %14 = tpu.dynamic_rotate %1 by %c1_i32 dim 1 : vector<4x512xf32>, i32 -> vector<4x512xf32>
    %15 = arith.truncf %14 : vector<4x512xf32> to vector<4x512xbf16>
    %c0_3 = arith.constant 0 : index
    %c0_4 = arith.constant 0 : index
    %c0_5 = arith.constant 0 : index
    %16 = vector.load %arg2[%c0_3, %c0_4, %c0_5] : memref<3x4x4xbf16, #tpu.memory_space<vmem>>, vector<1x4x4xbf16>
    %17 = vector.shape_cast %16 : vector<1x4x4xbf16> to vector<4x4xbf16>
    %cst_6 = arith.constant dense<0.000000e+00> : vector<4x512xf32>
    %18 = tpu.matmul %17, %15, %cst_6 {dimension_numbers = #tpu.dot_dimension_numbers<[1], [0], [0], [1], [0, 0, 1, 1], [], []>} : vector<4x4xbf16>, vector<4x512xbf16>, vector<4x512xf32> -> vector<4x512xf32>
    %c1_i32_7 = arith.constant 1 : i32
    %19 = vector.broadcast %c1_i32_7 : i32 to vector<1x512xi32>
    %20 = arith.cmpi sge, %4, %19 : vector<1x512xi32>
    %cst_8 = arith.constant 0.000000e+00 : f32
    %21 = vector.shape_cast %20 : vector<1x512xi1> to vector<1x512xi1>
    %22 = vector.broadcast %21 : vector<1x512xi1> to vector<4x512xi1>
    %23 = vector.broadcast %cst_8 : f32 to vector<4x512xf32>
    %24 = arith.select %22, %18, %23 : vector<4x512xi1>, vector<4x512xf32>
    %25 = arith.addf %13, %24 : vector<4x512xf32>
    %c511_i32 = arith.constant 511 : i32
    %26 = tpu.dynamic_rotate %1 by %c511_i32 dim 1 : vector<4x512xf32>, i32 -> vector<4x512xf32>
    %27 = arith.truncf %26 : vector<4x512xf32> to vector<4x512xbf16>
    %c2 = arith.constant 2 : index
    %c0_9 = arith.constant 0 : index
    %c0_10 = arith.constant 0 : index
    %28 = vector.load %arg2[%c2, %c0_9, %c0_10] : memref<3x4x4xbf16, #tpu.memory_space<vmem>>, vector<1x4x4xbf16>
    %29 = vector.shape_cast %28 : vector<1x4x4xbf16> to vector<4x4xbf16>
    %cst_11 = arith.constant dense<0.000000e+00> : vector<4x512xf32>
    %30 = tpu.matmul %29, %27, %cst_11 {dimension_numbers = #tpu.dot_dimension_numbers<[1], [0], [0], [1], [0, 0, 1, 1], [], []>} : vector<4x4xbf16>, vector<4x512xbf16>, vector<4x512xf32> -> vector<4x512xf32>
    %c15_i32_12 = arith.constant 15 : i32
    %31 = vector.broadcast %c15_i32_12 : i32 to vector<1x512xi32>
    %32 = arith.cmpi slt, %4, %31 : vector<1x512xi32>
    %cst_13 = arith.constant 0.000000e+00 : f32
    %33 = vector.shape_cast %32 : vector<1x512xi1> to vector<1x512xi1>
    %34 = vector.broadcast %33 : vector<1x512xi1> to vector<4x512xi1>
    %35 = vector.broadcast %cst_13 : f32 to vector<4x512xf32>
    %36 = arith.select %34, %30, %35 : vector<4x512xi1>, vector<4x512xf32>
    %37 = arith.addf %25, %36 : vector<4x512xf32>
    %c0_14 = arith.constant 0 : index
    %c0_15 = arith.constant 0 : index
    %38 = vector.load %arg3[%c0_14, %c0_15] : memref<4x1xf32, #tpu.memory_space<vmem>>, vector<4x1xf32>
    %39 = vector.broadcast %38 : vector<4x1xf32> to vector<4x512xf32>
    %40 = arith.addf %37, %39 : vector<4x512xf32>
    %c1_16 = arith.constant 1 : index
    %c0_17 = arith.constant 0 : index
    %c0_18 = arith.constant 0 : index
    %41 = vector.load %arg4[%c1_16, %c0_17, %c0_18] : memref<3x4x4xbf16, #tpu.memory_space<vmem>>, vector<1x4x4xbf16>
    %42 = vector.shape_cast %41 : vector<1x4x4xbf16> to vector<4x4xbf16>
    %43 = arith.truncf %40 : vector<4x512xf32> to vector<4x512xbf16>
    %cst_19 = arith.constant dense<0.000000e+00> : vector<4x512xf32>
    %44 = tpu.matmul %42, %43, %cst_19 {dimension_numbers = #tpu.dot_dimension_numbers<[1], [0], [0], [1], [0, 0, 1, 1], [], []>} : vector<4x4xbf16>, vector<4x512xbf16>, vector<4x512xf32> -> vector<4x512xf32>
    %c16_i32 = arith.constant 16 : i32
    %45 = tpu.dynamic_rotate %40 by %c16_i32 dim 1 : vector<4x512xf32>, i32 -> vector<4x512xf32>
    %46 = arith.truncf %45 : vector<4x512xf32> to vector<4x512xbf16>
    %c0_20 = arith.constant 0 : index
    %c0_21 = arith.constant 0 : index
    %c0_22 = arith.constant 0 : index
    %47 = vector.load %arg4[%c0_20, %c0_21, %c0_22] : memref<3x4x4xbf16, #tpu.memory_space<vmem>>, vector<1x4x4xbf16>
    %48 = vector.shape_cast %47 : vector<1x4x4xbf16> to vector<4x4xbf16>
    %cst_23 = arith.constant dense<0.000000e+00> : vector<4x512xf32>
    %49 = tpu.matmul %48, %46, %cst_23 {dimension_numbers = #tpu.dot_dimension_numbers<[1], [0], [0], [1], [0, 0, 1, 1], [], []>} : vector<4x4xbf16>, vector<4x512xbf16>, vector<4x512xf32> -> vector<4x512xf32>
    %c1_i32_24 = arith.constant 1 : i32
    %50 = vector.broadcast %c1_i32_24 : i32 to vector<1x512xi32>
    %51 = arith.cmpi sge, %8, %50 : vector<1x512xi32>
    %cst_25 = arith.constant 0.000000e+00 : f32
    %52 = vector.shape_cast %51 : vector<1x512xi1> to vector<1x512xi1>
    %53 = vector.broadcast %52 : vector<1x512xi1> to vector<4x512xi1>
    %54 = vector.broadcast %cst_25 : f32 to vector<4x512xf32>
    %55 = arith.select %53, %49, %54 : vector<4x512xi1>, vector<4x512xf32>
    %56 = arith.addf %44, %55 : vector<4x512xf32>
    %c496_i32 = arith.constant 496 : i32
    %57 = tpu.dynamic_rotate %40 by %c496_i32 dim 1 : vector<4x512xf32>, i32 -> vector<4x512xf32>
    %58 = arith.truncf %57 : vector<4x512xf32> to vector<4x512xbf16>
    %c2_26 = arith.constant 2 : index
    %c0_27 = arith.constant 0 : index
    %c0_28 = arith.constant 0 : index
    %59 = vector.load %arg4[%c2_26, %c0_27, %c0_28] : memref<3x4x4xbf16, #tpu.memory_space<vmem>>, vector<1x4x4xbf16>
    %60 = vector.shape_cast %59 : vector<1x4x4xbf16> to vector<4x4xbf16>
    %cst_29 = arith.constant dense<0.000000e+00> : vector<4x512xf32>
    %61 = tpu.matmul %60, %58, %cst_29 {dimension_numbers = #tpu.dot_dimension_numbers<[1], [0], [0], [1], [0, 0, 1, 1], [], []>} : vector<4x4xbf16>, vector<4x512xbf16>, vector<4x512xf32> -> vector<4x512xf32>
    %c15_i32_30 = arith.constant 15 : i32
    %62 = vector.broadcast %c15_i32_30 : i32 to vector<1x512xi32>
    %63 = arith.cmpi slt, %8, %62 : vector<1x512xi32>
    %cst_31 = arith.constant 0.000000e+00 : f32
    %64 = vector.shape_cast %63 : vector<1x512xi1> to vector<1x512xi1>
    %65 = vector.broadcast %64 : vector<1x512xi1> to vector<4x512xi1>
    %66 = vector.broadcast %cst_31 : f32 to vector<4x512xf32>
    %67 = arith.select %65, %61, %66 : vector<4x512xi1>, vector<4x512xf32>
    %68 = arith.addf %56, %67 : vector<4x512xf32>
    %c0_32 = arith.constant 0 : index
    %c0_33 = arith.constant 0 : index
    %69 = vector.load %arg5[%c0_32, %c0_33] : memref<4x1xf32, #tpu.memory_space<vmem>>, vector<4x1xf32>
    %70 = vector.broadcast %69 : vector<4x1xf32> to vector<4x512xf32>
    %71 = arith.addf %68, %70 : vector<4x512xf32>
    %c0_34 = arith.constant 0 : index
    %c0_35 = arith.constant 0 : index
    %72 = vector.load %arg6[%c0_34, %c0_35] : memref<4x4xbf16, #tpu.memory_space<vmem>>, vector<4x4xbf16>
    %cst_36 = arith.constant dense<0.000000e+00> : vector<4x512xf32>
    %73 = tpu.matmul %72, %0, %cst_36 {dimension_numbers = #tpu.dot_dimension_numbers<[1], [0], [0], [1], [0, 0, 1, 1], [], []>} : vector<4x4xbf16>, vector<4x512xbf16>, vector<4x512xf32> -> vector<4x512xf32>
    %c0_37 = arith.constant 0 : index
    %c0_38 = arith.constant 0 : index
    %74 = vector.load %arg7[%c0_37, %c0_38] : memref<4x4xbf16, #tpu.memory_space<vmem>>, vector<4x4xbf16>
    %cst_39 = arith.constant dense<0.000000e+00> : vector<4x512xf32>
    %75 = tpu.matmul %74, %0, %cst_39 {dimension_numbers = #tpu.dot_dimension_numbers<[1], [0], [0], [1], [0, 0, 1, 1], [], []>} : vector<4x4xbf16>, vector<4x512xbf16>, vector<4x512xf32> -> vector<4x512xf32>
    %cst_40 = arith.constant 0.000000e+00 : f32
    %76 = vector.broadcast %cst_40 : f32 to vector<4x512xf32>
    %c0_i32 = arith.constant 0 : i32
    %77 = vector.broadcast %c0_i32 : i32 to vector<1x512xi32>
    %78 = arith.cmpi eq, %10, %77 : vector<1x512xi32>
    %cst_41 = arith.constant 0.000000e+00 : f32
    %79 = vector.shape_cast %78 : vector<1x512xi1> to vector<1x512xi1>
    %80 = vector.broadcast %79 : vector<1x512xi1> to vector<4x512xi1>
    %81 = vector.broadcast %cst_41 : f32 to vector<4x512xf32>
    %82 = arith.select %80, %1, %81 : vector<4x512xi1>, vector<4x512xf32>
    %cst_42 = arith.constant dense<0.000000e+00> : vector<4xf32>
    %83 = vector.multi_reduction <add>, %82, %cst_42 [1] : vector<4x512xf32> to vector<4xf32>
    %84 = vector.shape_cast %83 : vector<4xf32> to vector<4x1xf32>
    %cst_43 = arith.constant 3.906250e-03 : f32
    %85 = vector.broadcast %cst_43 : f32 to vector<4x1xf32>
    %86 = arith.mulf %84, %85 : vector<4x1xf32>
    %c0_44 = arith.constant 0 : index
    %c0_45 = arith.constant 0 : index
    %87 = vector.load %arg8[%c0_44, %c0_45] : memref<1x4xf32, #tpu.memory_space<vmem>>, vector<1x4xf32>
    %cst_46 = arith.constant dense<0.000000e+00> : vector<1x1xf32>
    %88 = tpu.matmul %87, %86, %cst_46 {dimension_numbers = #tpu.dot_dimension_numbers<[1], [0], [0], [1], [0, 0, 1, 1], [], []>} : vector<1x4xf32>, vector<4x1xf32>, vector<1x1xf32> -> vector<1x1xf32>
    %c0_47 = arith.constant 0 : index
    %c0_48 = arith.constant 0 : index
    %89 = vector.load %arg9[%c0_47, %c0_48] : memref<1x1xf32, #tpu.memory_space<vmem>>, vector<1x1xf32>
    %90 = arith.addf %88, %89 : vector<1x1xf32>
    %cst_49 = arith.constant 0.000000e+00 : f32
    %91 = vector.broadcast %cst_49 : f32 to vector<1x1xf32>
    %92 = arith.maximumf %90, %91 : vector<1x1xf32>
    %c0_50 = arith.constant 0 : index
    %c0_51 = arith.constant 0 : index
    %93 = vector.load %arg10[%c0_50, %c0_51] : memref<4x1xf32, #tpu.memory_space<vmem>>, vector<4x1xf32>
    %cst_52 = arith.constant dense<0.000000e+00> : vector<4x1xf32>
    %94 = tpu.matmul %93, %92, %cst_52 {dimension_numbers = #tpu.dot_dimension_numbers<[1], [0], [0], [1], [0, 0, 1, 1], [], []>} : vector<4x1xf32>, vector<1x1xf32>, vector<4x1xf32> -> vector<4x1xf32>
    %c0_53 = arith.constant 0 : index
    %c0_54 = arith.constant 0 : index
    %95 = vector.load %arg11[%c0_53, %c0_54] : memref<4x1xf32, #tpu.memory_space<vmem>>, vector<4x1xf32>
    %96 = arith.addf %94, %95 : vector<4x1xf32>
    %97 = arith.negf %96 : vector<4x1xf32>
    %98 = math.exp %97 : vector<4x1xf32>
    %cst_55 = arith.constant 1.000000e+00 : f32
    %99 = vector.broadcast %cst_55 : f32 to vector<4x1xf32>
    %100 = arith.addf %99, %98 : vector<4x1xf32>
    %101 = arith.divf %99, %100 : vector<4x1xf32>
    %cst_56 = arith.constant 0.000000e+00 : f32
    %102 = vector.shape_cast %78 : vector<1x512xi1> to vector<1x512xi1>
    %103 = vector.broadcast %102 : vector<1x512xi1> to vector<4x512xi1>
    %104 = vector.shape_cast %101 : vector<4x1xf32> to vector<4x1xf32>
    %105 = vector.broadcast %104 : vector<4x1xf32> to vector<4x512xf32>
    %106 = vector.broadcast %cst_56 : f32 to vector<4x512xf32>
    %107 = arith.select %103, %105, %106 : vector<4x512xi1>, vector<4x512xf32>
    %108 = arith.addf %76, %107 : vector<4x512xf32>
    %c1_i32_57 = arith.constant 1 : i32
    %109 = vector.broadcast %c1_i32_57 : i32 to vector<1x512xi32>
    %110 = arith.cmpi eq, %10, %109 : vector<1x512xi32>
    %cst_58 = arith.constant 0.000000e+00 : f32
    %111 = vector.shape_cast %110 : vector<1x512xi1> to vector<1x512xi1>
    %112 = vector.broadcast %111 : vector<1x512xi1> to vector<4x512xi1>
    %113 = vector.broadcast %cst_58 : f32 to vector<4x512xf32>
    %114 = arith.select %112, %1, %113 : vector<4x512xi1>, vector<4x512xf32>
    %cst_59 = arith.constant dense<0.000000e+00> : vector<4xf32>
    %115 = vector.multi_reduction <add>, %114, %cst_59 [1] : vector<4x512xf32> to vector<4xf32>
    %116 = vector.shape_cast %115 : vector<4xf32> to vector<4x1xf32>
    %cst_60 = arith.constant 3.906250e-03 : f32
    %117 = vector.broadcast %cst_60 : f32 to vector<4x1xf32>
    %118 = arith.mulf %116, %117 : vector<4x1xf32>
    %c0_61 = arith.constant 0 : index
    %c0_62 = arith.constant 0 : index
    %119 = vector.load %arg8[%c0_61, %c0_62] : memref<1x4xf32, #tpu.memory_space<vmem>>, vector<1x4xf32>
    %cst_63 = arith.constant dense<0.000000e+00> : vector<1x1xf32>
    %120 = tpu.matmul %119, %118, %cst_63 {dimension_numbers = #tpu.dot_dimension_numbers<[1], [0], [0], [1], [0, 0, 1, 1], [], []>} : vector<1x4xf32>, vector<4x1xf32>, vector<1x1xf32> -> vector<1x1xf32>
    %c0_64 = arith.constant 0 : index
    %c0_65 = arith.constant 0 : index
    %121 = vector.load %arg9[%c0_64, %c0_65] : memref<1x1xf32, #tpu.memory_space<vmem>>, vector<1x1xf32>
    %122 = arith.addf %120, %121 : vector<1x1xf32>
    %cst_66 = arith.constant 0.000000e+00 : f32
    %123 = vector.broadcast %cst_66 : f32 to vector<1x1xf32>
    %124 = arith.maximumf %122, %123 : vector<1x1xf32>
    %c0_67 = arith.constant 0 : index
    %c0_68 = arith.constant 0 : index
    %125 = vector.load %arg10[%c0_67, %c0_68] : memref<4x1xf32, #tpu.memory_space<vmem>>, vector<4x1xf32>
    %cst_69 = arith.constant dense<0.000000e+00> : vector<4x1xf32>
    %126 = tpu.matmul %125, %124, %cst_69 {dimension_numbers = #tpu.dot_dimension_numbers<[1], [0], [0], [1], [0, 0, 1, 1], [], []>} : vector<4x1xf32>, vector<1x1xf32>, vector<4x1xf32> -> vector<4x1xf32>
    %c0_70 = arith.constant 0 : index
    %c0_71 = arith.constant 0 : index
    %127 = vector.load %arg11[%c0_70, %c0_71] : memref<4x1xf32, #tpu.memory_space<vmem>>, vector<4x1xf32>
    %128 = arith.addf %126, %127 : vector<4x1xf32>
    %129 = arith.negf %128 : vector<4x1xf32>
    %130 = math.exp %129 : vector<4x1xf32>
    %cst_72 = arith.constant 1.000000e+00 : f32
    %131 = vector.broadcast %cst_72 : f32 to vector<4x1xf32>
    %132 = arith.addf %131, %130 : vector<4x1xf32>
    %133 = arith.divf %131, %132 : vector<4x1xf32>
    %cst_73 = arith.constant 0.000000e+00 : f32
    %134 = vector.shape_cast %110 : vector<1x512xi1> to vector<1x512xi1>
    %135 = vector.broadcast %134 : vector<1x512xi1> to vector<4x512xi1>
    %136 = vector.shape_cast %133 : vector<4x1xf32> to vector<4x1xf32>
    %137 = vector.broadcast %136 : vector<4x1xf32> to vector<4x512xf32>
    %138 = vector.broadcast %cst_73 : f32 to vector<4x512xf32>
    %139 = arith.select %135, %137, %138 : vector<4x512xi1>, vector<4x512xf32>
    %140 = arith.addf %108, %139 : vector<4x512xf32>
    %141 = arith.subf %73, %71 : vector<4x512xf32>
    %142 = arith.mulf %140, %75 : vector<4x512xf32>
    %143 = arith.addf %141, %142 : vector<4x512xf32>
    %c0_74 = arith.constant 0 : index
    %c0_75 = arith.constant 0 : index
    %144 = vector.load %arg12[%c0_74, %c0_75] : memref<4x512xf32, #tpu.memory_space<vmem>>, vector<4x512xf32>
    tpu.vector_store %arg12[%c0_74, %c0_75], %143 {strides = array<i32>} : memref<4x512xf32, #tpu.memory_space<vmem>>, vector<4x512xf32>,
    return
  }
  func.func @transform_0(%arg0: i32) -> (i32, i32) {
    %c0_i32 = arith.constant 0 : i32
    %c0_i32_0 = arith.constant 0 : i32
    %c0_i32_1 = arith.constant 0 : i32
    return %c0_i32, %c0_i32_0 : i32, i32
  }
  func.func @transform_1(%arg0: i32) -> (i32, i32, i32) {
    %c0_i32 = arith.constant 0 : i32
    %c0_i32_0 = arith.constant 0 : i32
    %c0_i32_1 = arith.constant 0 : i32
    %c0_i32_2 = arith.constant 0 : i32
    return %c0_i32, %c0_i32_0, %c0_i32_1 : i32, i32, i32
  }
  func.func @transform_2(%arg0: i32) -> (i32, i32) {
    %c0_i32 = arith.constant 0 : i32
    %c0_i32_0 = arith.constant 0 : i32
    %c0_i32_1 = arith.constant 0 : i32
    return %c0_i32, %c0_i32_0 : i32, i32
  }
  func.func @transform_3(%arg0: i32) -> (i32, i32, i32) {
    %c0_i32 = arith.constant 0 : i32
    %c0_i32_0 = arith.constant 0 : i32
    %c0_i32_1 = arith.constant 0 : i32
    %c0_i32_2 = arith.constant 0 : i32
    return %c0_i32, %c0_i32_0, %c0_i32_1 : i32, i32, i32
  }
  func.func @transform_4(%arg0: i32) -> (i32, i32) {
    %c0_i32 = arith.constant 0 : i32
    %c0_i32_0 = arith.constant 0 : i32
    %c0_i32_1 = arith.constant 0 : i32
    return %c0_i32, %c0_i32_0 : i32, i32
  }
  func.func @transform_5(%arg0: i32) -> (i32, i32) {
    %c0_i32 = arith.constant 0 : i32
    %c0_i32_0 = arith.constant 0 : i32
    %c0_i32_1 = arith.constant 0 : i32
    return %c0_i32, %c0_i32_0 : i32, i32
  }
  func.func @transform_6(%arg0: i32) -> (i32, i32) {
    %c0_i32 = arith.constant 0 : i32
    %c0_i32_0 = arith.constant 0 : i32
    %c0_i32_1 = arith.constant 0 : i32
    return %c0_i32, %c0_i32_0 : i32, i32
  }
  func.func @transform_7(%arg0: i32) -> (i32, i32) {
    %c0_i32 = arith.constant 0 : i32
    %c0_i32_0 = arith.constant 0 : i32
    %c0_i32_1 = arith.constant 0 : i32
    return %c0_i32, %c0_i32_0 : i32, i32
  }
  func.func @transform_8(%arg0: i32) -> (i32, i32) {
    %c0_i32 = arith.constant 0 : i32
    %c0_i32_0 = arith.constant 0 : i32
    %c0_i32_1 = arith.constant 0 : i32
    return %c0_i32, %c0_i32_0 : i32, i32
  }
  func.func @transform_9(%arg0: i32) -> (i32, i32) {
    %c0_i32 = arith.constant 0 : i32
    %c0_i32_0 = arith.constant 0 : i32
    %c0_i32_1 = arith.constant 0 : i32
    return %c0_i32, %c0_i32_0 : i32, i32
  }
  func.func @transform_10(%arg0: i32) -> (i32, i32) {
    %c0_i32 = arith.constant 0 : i32
    %c0_i32_0 = arith.constant 0 : i32
    %c0_i32_1 = arith.constant 0 : i32
    return %c0_i32, %c0_i32_0 : i32, i32
  }
  func.func @transform_11(%arg0: i32) -> (i32, i32) {
    %c0_i32 = arith.constant 0 : i32
    %c0_i32_0 = arith.constant 0 : i32
    %c0_i32_1 = arith.constant 0 : i32
    return %c0_i32, %c0_i32_0 : i32, i32
  }
}

</mosaic_0001>

<llo_original>
// kernel: tpu_custom_call.1
$region0: #{tpu_custom_call.1}
  #allocation0 [shape = 'u32[]', space=smem, size = 0x4, offset = 0x4, fixed_abs, tag = 'smem constant byte address 0x4 - core index']
  #allocation1 [shape = 'u32[144,128]{1,0:T(1,128)}', space=vmem, size = 0x12000, scoped, tag = 'internal scratch']
  #allocation2 [shape = 'f32[1,1]{1,0:T(1,128)S(1)}', space=vmem, size = 0x200, scoped, tag = 'scoped memory for tpu_custom_call.1']
  %s0 = inlined_call_operand.vmem [shape: bf16[4,512], index: 0, kind: input, shape index: {}]
  %s1 = inlined_call_operand.vmem [shape: bf16[3,4,4], index: 1, kind: input, shape index: {}]
  %s2 = inlined_call_operand.vmem [shape: f32[4,1], index: 2, kind: input, shape index: {}]
  %s3 = inlined_call_operand.vmem [shape: bf16[3,4,4], index: 3, kind: input, shape index: {}]
  %s4 = inlined_call_operand.vmem [shape: f32[4,1], index: 4, kind: input, shape index: {}]
  %s5 = inlined_call_operand.vmem [shape: bf16[4,4], index: 5, kind: input, shape index: {}]
  %s6 = inlined_call_operand.vmem [shape: bf16[4,4], index: 6, kind: input, shape index: {}]
  %s7 = inlined_call_operand.vmem [shape: f32[1,4], index: 7, kind: input, shape index: {}]
  %s8 = inlined_call_operand.<no memory space> [shape: f32[1,1], index: 8, kind: input, shape index: {}]
  %s9 = inlined_call_operand.vmem [shape: f32[4,1], index: 9, kind: input, shape index: {}]
  %s10 = inlined_call_operand.vmem [shape: f32[4,1], index: 10, kind: input, shape index: {}]
  %s11 = inlined_call_operand.hbm [shape: f32[4,512], index: 11, kind: output, shape index: {}]
  %s12 = sld [smem:[#allocation0]]
  $region54: #{tpu_custom_call.1} parent=0
    _
  %s14 = ssub.s32 1, %s12
  %s15 = scalar_select 0, %s14, %s12
  %v16 = vstv %s8
  %17 = vst [vmem:[#allocation2] sm:$0x1] %v16
  $region1: #{tpu_custom_call.1} parent=0
    #allocation3 [shape = 'u8[8192]{0}', space=vmem, size = 0x2000, scoped, tag = 'output window, operand 0, single buffered']
    #allocation4 [shape = 's32[1]{0}', space=sflag, size = 0x4, scoped, tag = 'scoped memory for tpu_custom_call.1']
    %18 = vsyncpa [#allocation4], 0
    // Predicated region
    $region2: #{tpu_custom_call.1} parent=1 // pred_check
      _
    $region3: #{tpu_custom_call.1} parent=1 // pred_check_branch
      %20 = sbr.rel (0) target = $region5
    $region4: #{tpu_custom_call.1} parent=1 // pred_region
      _
    $region5: #{tpu_custom_call.1} parent=1 // pred_fallthru
      _
    // Predicated region
    $region6: #{tpu_custom_call.1} parent=1 // pred_check
      _
    $region7: #{tpu_custom_call.1} parent=1 // pred_check_branch
      %22 = sbr.rel (0) target = $region9
    $region8: #{tpu_custom_call.1} parent=1 // pred_region
      _
    $region9: #{tpu_custom_call.1} parent=1 // pred_fallthru
      _
    // Predicated region
    $region10: #{tpu_custom_call.1} parent=1 // pred_check
      _
    $region11: #{tpu_custom_call.1} parent=1 // pred_check_branch
      %24 = sbr.rel (0) target = $region13
    $region12: #{tpu_custom_call.1} parent=1 // pred_region
      _
    $region13: #{tpu_custom_call.1} parent=1 // pred_fallthru
      _
    // Predicated region
    $region14: #{tpu_custom_call.1} parent=1 // pred_check
      _
    $region15: #{tpu_custom_call.1} parent=1 // pred_check_branch
      %26 = sbr.rel (0) target = $region17
    $region16: #{tpu_custom_call.1} parent=1 // pred_region
      _
    $region17: #{tpu_custom_call.1} parent=1 // pred_fallthru
      _
    // Predicated region
    $region18: #{tpu_custom_call.1} parent=1 // pred_check
      _
    $region19: #{tpu_custom_call.1} parent=1 // pred_check_branch
      %28 = sbr.rel (0) target = $region21
    $region20: #{tpu_custom_call.1} parent=1 // pred_region
      _
    $region21: #{tpu_custom_call.1} parent=1 // pred_fallthru
      _
    // Predicated region
    $region22: #{tpu_custom_call.1} parent=1 // pred_check
      _
    $region23: #{tpu_custom_call.1} parent=1 // pred_check_branch
      %30 = sbr.rel (0) target = $region25
    $region24: #{tpu_custom_call.1} parent=1 // pred_region
      _
    $region25: #{tpu_custom_call.1} parent=1 // pred_fallthru
      _
    // Predicated region
    $region26: #{tpu_custom_call.1} parent=1 // pred_check
      _
    $region27: #{tpu_custom_call.1} parent=1 // pred_check_branch
      %32 = sbr.rel (0) target = $region29
    $region28: #{tpu_custom_call.1} parent=1 // pred_region
      _
    $region29: #{tpu_custom_call.1} parent=1 // pred_fallthru
      _
    // Predicated region
    $region30: #{tpu_custom_call.1} parent=1 // pred_check
      _
    $region31: #{tpu_custom_call.1} parent=1 // pred_check_branch
      %34 = sbr.rel (0) target = $region33
    $region32: #{tpu_custom_call.1} parent=1 // pred_region
      _
    $region33: #{tpu_custom_call.1} parent=1 // pred_fallthru
      _
    // Predicated region
    $region34: #{tpu_custom_call.1} parent=1 // pred_check
      _
    $region35: #{tpu_custom_call.1} parent=1 // pred_check_branch
      %36 = sbr.rel (0) target = $region37
    $region36: #{tpu_custom_call.1} parent=1 // pred_region
      _
    $region37: #{tpu_custom_call.1} parent=1 // pred_fallthru
      _
    // Predicated region
    $region38: #{tpu_custom_call.1} parent=1 // pred_check
      _
    $region39: #{tpu_custom_call.1} parent=1 // pred_check_branch
      %38 = sbr.rel (0) target = $region41
    $region40: #{tpu_custom_call.1} parent=1 // pred_region
      _
    $region41: #{tpu_custom_call.1} parent=1 // pred_fallthru
      _
    // Predicated region
    $region42: #{tpu_custom_call.1} parent=1 // pred_check
      _
    $region43: #{tpu_custom_call.1} parent=1 // pred_check_branch
      %40 = sbr.rel (0) target = $region45
    $region44: #{tpu_custom_call.1} parent=1 // pred_region
      _
    $region45: #{tpu_custom_call.1} parent=1 // pred_fallthru
      _
    %v42 = vld [vmem:[%s0] sm:$0xff]
    %v43 = vunpack.c.l.bf16 %v42
    %v44 = vunpack.c.h.bf16 %v42
    %v45 = vlaneseq
    %v46 = vand.u32 %v45, 127
    %v47 = vadd.s32 %v46, 128
    %v48 = vadd.s32 %v46, 256
    %v49 = vadd.s32 %v46, 384
    %v50 = vand.u32 %v46, 15
    %v51 = vand.u32 %v47, 15
    %v52 = vand.u32 %v48, 15
    %v53 = vand.u32 %v49, 15
    %v54 = vand.u32 %v46, 255
    %v55 = vand.u32 %v47, 255
    %v56 = vand.u32 %v48, 255
    %v57 = vand.u32 %v49, 255
    %v58 = vshra.s32 %v54, 4
    %v59 = vshra.s32 %v55, 4
    %v60 = vshra.s32 %v56, 4
    %v61 = vshra.s32 %v57, 4
    %v62 = vshra.s32 %v46, 8
    %v63 = vshra.s32 %v47, 8
    %v64 = vshra.s32 %v48, 8
    %v65 = vshra.s32 %v49, 8
    %s66 = scalar_lea.vmem %s1, 2
    %v67 = vld [vmem:[%s66] sm:$0x3]
    %v70 = vcombine.high %v43, %v43
    %v71 = vcombine.high %v44, %v44
    %74 = vrot.lane.b32.xlu0 %v43, 1
    %v75 = vpop.permute.xlu0 %74
    %76 = vrot.lane.b32.xlu0 %v70, 1
    %v77 = vpop.permute.xlu0 %76
    %78 = vrot.lane.b32.xlu0 %v44, 1
    %v79 = vpop.permute.xlu0 %78
    %80 = vrot.lane.b32.xlu0 %v71, 1
    %v81 = vpop.permute.xlu0 %80
    %vm82 = vcmp.lt.s32.totalorder %v46, 1
    %v83 = vsel %vm82, %v79, %v81
    %v84 = vsel %vm82, %v77, %v79
    %v85 = vsel %vm82, %v75, %v77
    %v86 = vsel %vm82, %v81, %v75
    %v87 = vpack.c.bf16 %v86, %v86
    %v88 = vpack.c.bf16 %v85, %v85
    %v89 = vpack.c.bf16 %v84, %v84
    %v90 = vpack.c.bf16 %v83, %v83
    %v91 = vld [vmem:[%s1] sm:$0x3]
    %vm92 = vcmask 31744
    %v94 = vsel %vm92, %v91, 0
    %vm96 = vcmask 1041408
    %v98 = vsel %vm96, %v87, 0
    %v101 = vsel %vm96, %v88, 0
    %v104 = vsel %vm96, %v89, 0
    %v107 = vsel %vm96, %v90, 0
    %109 = vmatprep.subr.bf16.mxu0 0
    %110 = vmatpush1.bf16.msra.mxu0 0
    %111 = vmatprep.subr.bf16.mxu0 0
    %112 = vmatpush1.bf16.msra.mxu0 0
    %113 = vmatprep.subr.bf16.mxu0 0
    %114 = vmatpush1.bf16.msra.mxu0 0
    %115 = vmatprep.subr.bf16.mxu0 0
    %116 = vmatpush1.bf16.msra.mxu0 0
    %117 = vmatprep.subr.bf16.mxu0 0
    %118 = vmatpush1.bf16.msra.mxu0 0
    %119 = vmatprep.subr.bf16.mxu0 0
    %120 = vmatpush1.bf16.msra.mxu0 0
    %121 = vmatprep.subr.bf16.mxu0 0
    %122 = vmatpush1.bf16.msra.mxu0 0
    %123 = vmatprep.subr.bf16.mxu0 %v101
    %124 = vmatpush1.bf16.msra.mxu0 %v98
    %125 = vmatprep.subr.bf16.mxu0 0
    %126 = vmatpush2.bf16.msra.mxu0 0
    %127 = vmatprep.subr.bf16.mxu0 0
    %128 = vmatpush2.bf16.msra.mxu0 0
    %129 = vmatprep.subr.bf16.mxu0 0
    %130 = vmatpush2.bf16.msra.mxu0 0
    %131 = vmatprep.subr.bf16.mxu0 0
    %132 = vmatpush2.bf16.msra.mxu0 0
    %133 = vmatprep.subr.bf16.mxu0 0
    %134 = vmatpush2.bf16.msra.mxu0 0
    %135 = vmatprep.subr.bf16.mxu0 0
    %136 = vmatpush2.bf16.msra.mxu0 0
    %137 = vmatprep.subr.bf16.mxu0 0
    %138 = vmatpush2.bf16.msra.mxu0 0
    %139 = vmatprep.subr.bf16.mxu0 0
    %140 = vmatpush2.bf16.msra.mxu0 0
    %141 = vmatprep.mubr.bf16.mxu0 0
    %142 = vmatmul.mubr.bf16.gmra.mxu0 %v94
    %v143 = vpop.f32.mrf.mxu0
    %v144 = vadd.f32 0.0, %v143
    %v145 = vpop.f32.mrf.mxu0
    %v146 = vadd.f32 0.0, %v145
    %v147 = vpop.f32.mrf.mxu0
    %v148 = vpop.f32.mrf.mxu0
    %149 = vdwg.mxu0
    %150 = vmatprep.subr.bf16.mxu0 0
    %151 = vmatpush1.bf16.msra.mxu0 0
    %152 = vmatprep.subr.bf16.mxu0 0
    %153 = vmatpush1.bf16.msra.mxu0 0
    %154 = vmatprep.subr.bf16.mxu0 0
    %155 = vmatpush1.bf16.msra.mxu0 0
    %156 = vmatprep.subr.bf16.mxu0 0
    %157 = vmatpush1.bf16.msra.mxu0 0
    %158 = vmatprep.subr.bf16.mxu0 0
    %159 = vmatpush1.bf16.msra.mxu0 0
    %160 = vmatprep.subr.bf16.mxu0 0
    %161 = vmatpush1.bf16.msra.mxu0 0
    %162 = vmatprep.subr.bf16.mxu0 0
    %163 = vmatpush1.bf16.msra.mxu0 0
    %164 = vmatprep.subr.bf16.mxu0 %v107
    %165 = vmatpush1.bf16.msra.mxu0 %v104
    %166 = vmatprep.subr.bf16.mxu0 0
    %167 = vmatpush2.bf16.msra.mxu0 0
    %168 = vmatprep.subr.bf16.mxu0 0
    %169 = vmatpush2.bf16.msra.mxu0 0
    %170 = vmatprep.subr.bf16.mxu0 0
    %171 = vmatpush2.bf16.msra.mxu0 0
    %172 = vmatprep.subr.bf16.mxu0 0
    %173 = vmatpush2.bf16.msra.mxu0 0
    %174 = vmatprep.subr.bf16.mxu0 0
    %175 = vmatpush2.bf16.msra.mxu0 0
    %176 = vmatprep.subr.bf16.mxu0 0
    %177 = vmatpush2.bf16.msra.mxu0 0
    %178 = vmatprep.subr.bf16.mxu0 0
    %179 = vmatpush2.bf16.msra.mxu0 0
    %180 = vmatprep.subr.bf16.mxu0 0
    %181 = vmatpush2.bf16.msra.mxu0 0
    %182 = vmatprep.mubr.bf16.mxu0 0
    %183 = vmatmul.mubr.bf16.gmra.mxu0 %v94
    %v184 = vpop.f32.mrf.mxu0
    %v185 = vadd.f32 0.0, %v184
    %v186 = vpop.f32.mrf.mxu0
    %v187 = vadd.f32 0.0, %v186
    %v188 = vpop.f32.mrf.mxu0
    %v189 = vpop.f32.mrf.mxu0
    %190 = vdwg.mxu0
    %vm191 = vcmp.ge.s32.totalorder %v50, 1
    %vm192 = vcmp.ge.s32.totalorder %v51, 1
    %vm193 = vcmp.ge.s32.totalorder %v52, 1
    %vm194 = vcmp.ge.s32.totalorder %v53, 1
    %v195 = vsel %vm191, 1, 0
    %v196 = vsel %vm192, 1, 0
    %v197 = vsel %vm193, 1, 0
    %v198 = vsel %vm194, 1, 0
    %vm199 = vcmp.eq.s32.totalorder %v195, 1
    %vm200 = vcmp.eq.s32.totalorder %v196, 1
    %vm201 = vcmp.eq.s32.totalorder %v197, 1
    %vm202 = vcmp.eq.s32.totalorder %v198, 1
    %v203 = vsel %vm199, %v144, 0.0
    %v204 = vsel %vm200, %v146, 0.0
    %v205 = vsel %vm201, %v185, 0.0
    %v206 = vsel %vm202, %v187, 0.0
    %v208 = vcombine.high %v42, %v42
    %v210 = vunpack.c.l.s4 1983009808
    %v211 = vunpack.c.0.s8 %v210
    %v212 = vlaneseq
    %v213 = vshrl.u32 %v212, 7
    %v214 = vsub.s32 %v211, %v213
    %v215 = vrot.slane %v42, %v214
    %v217 = vunpack.c.l.s4 1983009808
    %v218 = vunpack.c.0.s8 %v217
    %v219 = vlaneseq
    %v220 = vshrl.u32 %v219, 7
    %v221 = vsub.s32 %v218, %v220
    %v222 = vrot.slane %v208, %v221
    %v223 = vcombine.high %v215, %v215
    %v224 = vcombine.high %v222, %v222
    %v226 = vsel %vm92, %v67, 0
    %v229 = vsel %vm96, %v215, 0
    %v232 = vsel %vm96, %v223, 0
    %v235 = vsel %vm96, %v222, 0
    %v238 = vsel %vm96, %v224, 0
    %240 = vmatprep.subr.bf16.mxu0 0
    %241 = vmatpush1.bf16.msra.mxu0 0
    %242 = vmatprep.subr.bf16.mxu0 0
    %243 = vmatpush1.bf16.msra.mxu0 0
    %244 = vmatprep.subr.bf16.mxu0 0
    %245 = vmatpush1.bf16.msra.mxu0 0
    %246 = vmatprep.subr.bf16.mxu0 0
    %247 = vmatpush1.bf16.msra.mxu0 0
    %248 = vmatprep.subr.bf16.mxu0 0
    %249 = vmatpush1.bf16.msra.mxu0 0
    %250 = vmatprep.subr.bf16.mxu0 0
    %251 = vmatpush1.bf16.msra.mxu0 0
    %252 = vmatprep.subr.bf16.mxu0 0
    %253 = vmatpush1.bf16.msra.mxu0 0
    %254 = vmatprep.subr.bf16.mxu0 %v232
    %255 = vmatpush1.bf16.msra.mxu0 %v229
    %256 = vmatprep.subr.bf16.mxu0 0
    %257 = vmatpush2.bf16.msra.mxu0 0
    %258 = vmatprep.subr.bf16.mxu0 0
    %259 = vmatpush2.bf16.msra.mxu0 0
    %260 = vmatprep.subr.bf16.mxu0 0
    %261 = vmatpush2.bf16.msra.mxu0 0
    %262 = vmatprep.subr.bf16.mxu0 0
    %263 = vmatpush2.bf16.msra.mxu0 0
    %264 = vmatprep.subr.bf16.mxu0 0
    %265 = vmatpush2.bf16.msra.mxu0 0
    %266 = vmatprep.subr.bf16.mxu0 0
    %267 = vmatpush2.bf16.msra.mxu0 0
    %268 = vmatprep.subr.bf16.mxu0 0
    %269 = vmatpush2.bf16.msra.mxu0 0
    %270 = vmatprep.subr.bf16.mxu0 0
    %271 = vmatpush2.bf16.msra.mxu0 0
    %272 = vmatprep.mubr.bf16.mxu0 0
    %273 = vmatmul.mubr.bf16.gmra.mxu0 %v226
    %v274 = vpop.f32.mrf.mxu0
    %v275 = vadd.f32 %v203, %v274
    %v276 = vpop.f32.mrf.mxu0
    %v277 = vadd.f32 %v204, %v276
    %v278 = vpop.f32.mrf.mxu0
    %v279 = vpop.f32.mrf.mxu0
    %280 = vdwg.mxu0
    %281 = vmatprep.subr.bf16.mxu0 0
    %282 = vmatpush1.bf16.msra.mxu0 0
    %283 = vmatprep.subr.bf16.mxu0 0
    %284 = vmatpush1.bf16.msra.mxu0 0
    %285 = vmatprep.subr.bf16.mxu0 0
    %286 = vmatpush1.bf16.msra.mxu0 0
    %287 = vmatprep.subr.bf16.mxu0 0
    %288 = vmatpush1.bf16.msra.mxu0 0
    %289 = vmatprep.subr.bf16.mxu0 0
    %290 = vmatpush1.bf16.msra.mxu0 0
    %291 = vmatprep.subr.bf16.mxu0 0
    %292 = vmatpush1.bf16.msra.mxu0 0
    %293 = vmatprep.subr.bf16.mxu0 0
    %294 = vmatpush1.bf16.msra.mxu0 0
    %295 = vmatprep.subr.bf16.mxu0 %v238
    %296 = vmatpush1.bf16.msra.mxu0 %v235
    %297 = vmatprep.subr.bf16.mxu0 0
    %298 = vmatpush2.bf16.msra.mxu0 0
    %299 = vmatprep.subr.bf16.mxu0 0
    %300 = vmatpush2.bf16.msra.mxu0 0
    %301 = vmatprep.subr.bf16.mxu0 0
    %302 = vmatpush2.bf16.msra.mxu0 0
    %303 = vmatprep.subr.bf16.mxu0 0
    %304 = vmatpush2.bf16.msra.mxu0 0
    %305 = vmatprep.subr.bf16.mxu0 0
    %306 = vmatpush2.bf16.msra.mxu0 0
    %307 = vmatprep.subr.bf16.mxu0 0
    %308 = vmatpush2.bf16.msra.mxu0 0
    %309 = vmatprep.subr.bf16.mxu0 0
    %310 = vmatpush2.bf16.msra.mxu0 0
    %311 = vmatprep.subr.bf16.mxu0 0
    %312 = vmatpush2.bf16.msra.mxu0 0
    %313 = vmatprep.mubr.bf16.mxu0 0
    %314 = vmatmul.mubr.bf16.gmra.mxu0 %v226
    %v315 = vpop.f32.mrf.mxu0
    %v316 = vadd.f32 %v205, %v315
    %v317 = vpop.f32.mrf.mxu0
    %v318 = vadd.f32 %v206, %v317
    %v319 = vpop.f32.mrf.mxu0
    %v320 = vpop.f32.mrf.mxu0
    %321 = vdwg.mxu0
    %322 = vrot.lane.b32.xlu0 %v43, 127
    %v323 = vpop.permute.xlu0 %322
    %324 = vrot.lane.b32.xlu0 %v70, 127
    %v325 = vpop.permute.xlu0 %324
    %326 = vrot.lane.b32.xlu0 %v44, 127
    %v327 = vpop.permute.xlu0 %326
    %328 = vrot.lane.b32.xlu0 %v71, 127
    %v329 = vpop.permute.xlu0 %328
    %vm330 = vcmp.lt.s32.totalorder %v46, 127
    %v331 = vsel %vm330, %v327, %v329
    %v332 = vsel %vm330, %v325, %v327
    %v333 = vsel %vm330, %v323, %v325
    %v334 = vsel %vm330, %v329, %v323
    %v335 = vpack.c.bf16 %v333, %v333
    %v336 = vpack.c.bf16 %v332, %v332
    %v337 = vpack.c.bf16 %v331, %v331
    %v338 = vpack.c.bf16 %v334, %v334
    %s339 = scalar_lea.vmem %s1, 4
    %v340 = vld [vmem:[%s339] sm:$0x3]
    %v342 = vsel %vm92, %v340, 0
    %v345 = vsel %vm96, %v335, 0
    %v348 = vsel %vm96, %v336, 0
    %v351 = vsel %vm96, %v337, 0
    %v354 = vsel %vm96, %v338, 0
    %356 = vmatprep.subr.bf16.mxu0 0
    %357 = vmatpush1.bf16.msra.mxu0 0
    %358 = vmatprep.subr.bf16.mxu0 0
    %359 = vmatpush1.bf16.msra.mxu0 0
    %360 = vmatprep.subr.bf16.mxu0 0
    %361 = vmatpush1.bf16.msra.mxu0 0
    %362 = vmatprep.subr.bf16.mxu0 0
    %363 = vmatpush1.bf16.msra.mxu0 0
    %364 = vmatprep.subr.bf16.mxu0 0
    %365 = vmatpush1.bf16.msra.mxu0 0
    %366 = vmatprep.subr.bf16.mxu0 0
    %367 = vmatpush1.bf16.msra.mxu0 0
    %368 = vmatprep.subr.bf16.mxu0 0
    %369 = vmatpush1.bf16.msra.mxu0 0
    %370 = vmatprep.subr.bf16.mxu0 %v348
    %371 = vmatpush1.bf16.msra.mxu0 %v345
    %372 = vmatprep.subr.bf16.mxu0 0
    %373 = vmatpush2.bf16.msra.mxu0 0
    %374 = vmatprep.subr.bf16.mxu0 0
    %375 = vmatpush2.bf16.msra.mxu0 0
    %376 = vmatprep.subr.bf16.mxu0 0
    %377 = vmatpush2.bf16.msra.mxu0 0
    %378 = vmatprep.subr.bf16.mxu0 0
    %379 = vmatpush2.bf16.msra.mxu0 0
    %380 = vmatprep.subr.bf16.mxu0 0
    %381 = vmatpush2.bf16.msra.mxu0 0
    %382 = vmatprep.subr.bf16.mxu0 0
    %383 = vmatpush2.bf16.msra.mxu0 0
    %384 = vmatprep.subr.bf16.mxu0 0
    %385 = vmatpush2.bf16.msra.mxu0 0
    %386 = vmatprep.subr.bf16.mxu0 0
    %387 = vmatpush2.bf16.msra.mxu0 0
    %388 = vmatprep.mubr.bf16.mxu0 0
    %389 = vmatmul.mubr.bf16.gmra.mxu0 %v342
    %v390 = vpop.f32.mrf.mxu0
    %v391 = vadd.f32 0.0, %v390
    %v392 = vpop.f32.mrf.mxu0
    %v393 = vadd.f32 0.0, %v392
    %v394 = vpop.f32.mrf.mxu0
    %v395 = vpop.f32.mrf.mxu0
    %396 = vdwg.mxu0
    %397 = vmatprep.subr.bf16.mxu0 0
    %398 = vmatpush1.bf16.msra.mxu0 0
    %399 = vmatprep.subr.bf16.mxu0 0
    %400 = vmatpush1.bf16.msra.mxu0 0
    %401 = vmatprep.subr.bf16.mxu0 0
    %402 = vmatpush1.bf16.msra.mxu0 0
    %403 = vmatprep.subr.bf16.mxu0 0
    %404 = vmatpush1.bf16.msra.mxu0 0
    %405 = vmatprep.subr.bf16.mxu0 0
    %406 = vmatpush1.bf16.msra.mxu0 0
    %407 = vmatprep.subr.bf16.mxu0 0
    %408 = vmatpush1.bf16.msra.mxu0 0
    %409 = vmatprep.subr.bf16.mxu0 0
    %410 = vmatpush1.bf16.msra.mxu0 0
    %411 = vmatprep.subr.bf16.mxu0 %v354
    %412 = vmatpush1.bf16.msra.mxu0 %v351
    %413 = vmatprep.subr.bf16.mxu0 0
    %414 = vmatpush2.bf16.msra.mxu0 0
    %415 = vmatprep.subr.bf16.mxu0 0
    %416 = vmatpush2.bf16.msra.mxu0 0
    %417 = vmatprep.subr.bf16.mxu0 0
    %418 = vmatpush2.bf16.msra.mxu0 0
    %419 = vmatprep.subr.bf16.mxu0 0
    %420 = vmatpush2.bf16.msra.mxu0 0
    %421 = vmatprep.subr.bf16.mxu0 0
    %422 = vmatpush2.bf16.msra.mxu0 0
    %423 = vmatprep.subr.bf16.mxu0 0
    %424 = vmatpush2.bf16.msra.mxu0 0
    %425 = vmatprep.subr.bf16.mxu0 0
    %426 = vmatpush2.bf16.msra.mxu0 0
    %427 = vmatprep.subr.bf16.mxu0 0
    %428 = vmatpush2.bf16.msra.mxu0 0
    %429 = vmatprep.mubr.bf16.mxu0 0
    %430 = vmatmul.mubr.bf16.gmra.mxu0 %v342
    %v431 = vpop.f32.mrf.mxu0
    %v432 = vadd.f32 0.0, %v431
    %v433 = vpop.f32.mrf.mxu0
    %v434 = vadd.f32 0.0, %v433
    %v435 = vpop.f32.mrf.mxu0
    %v436 = vpop.f32.mrf.mxu0
    %437 = vdwg.mxu0
    %vm438 = vcmp.lt.s32.totalorder %v50, 15
    %vm439 = vcmp.lt.s32.totalorder %v51, 15
    %vm440 = vcmp.lt.s32.totalorder %v52, 15
    %vm441 = vcmp.lt.s32.totalorder %v53, 15
    %v442 = vsel %vm438, 1, 0
    %v443 = vsel %vm439, 1, 0
    %v444 = vsel %vm440, 1, 0
    %v445 = vsel %vm441, 1, 0
    %vm446 = vcmp.eq.s32.totalorder %v442, 1
    %vm447 = vcmp.eq.s32.totalorder %v443, 1
    %vm448 = vcmp.eq.s32.totalorder %v444, 1
    %vm449 = vcmp.eq.s32.totalorder %v445, 1
    %v450 = vsel %vm446, %v391, 0.0
    %v451 = vsel %vm447, %v393, 0.0
    %v452 = vsel %vm448, %v432, 0.0
    %v453 = vsel %vm449, %v434, 0.0
    %v454 = vadd.f32 %v275, %v450
    %v455 = vadd.f32 %v277, %v451
    %v456 = vadd.f32 %v316, %v452
    %v457 = vadd.f32 %v318, %v453
    %v458 = vld [vmem:[%s2] sm:$0xf]
    %460 = vset.pattern.permute.xlu0 0
    %461 = vperm.xlu0 %460, %v458
    %v462 = vpop.permute.xlu0 %461
    %v464 = vadd.f32 %v454, %v462
    %v465 = vadd.f32 %v455, %v462
    %v466 = vadd.f32 %v456, %v462
    %v467 = vadd.f32 %v457, %v462
    %s468 = scalar_lea.vmem %s3, 2
    %v469 = vld [vmem:[%s468] sm:$0x3]
    %v470 = vpack.c.bf16 %v464, %v464
    %v471 = vpack.c.bf16 %v465, %v465
    %v472 = vpack.c.bf16 %v466, %v466
    %v473 = vpack.c.bf16 %v467, %v467
    %474 = vrot.lane.b32.xlu0 %v464, 16
    %v475 = vpop.permute.xlu0 %474
    %476 = vrot.lane.b32.xlu0 %v465, 16
    %v477 = vpop.permute.xlu0 %476
    %478 = vrot.lane.b32.xlu0 %v466, 16
    %v479 = vpop.permute.xlu0 %478
    %480 = vrot.lane.b32.xlu0 %v467, 16
    %v481 = vpop.permute.xlu0 %480
    %vm482 = vcmp.lt.s32.totalorder %v46, 16
    %v483 = vsel %vm482, %v479, %v481
    %v484 = vsel %vm482, %v477, %v479
    %v485 = vsel %vm482, %v475, %v477
    %v486 = vsel %vm482, %v481, %v475
    %v487 = vpack.c.bf16 %v486, %v486
    %v488 = vpack.c.bf16 %v485, %v485
    %v489 = vpack.c.bf16 %v484, %v484
    %v490 = vpack.c.bf16 %v483, %v483
    %v491 = vld [vmem:[%s3] sm:$0x3]
    %v493 = vsel %vm92, %v491, 0
    %v496 = vsel %vm96, %v487, 0
    %v499 = vsel %vm96, %v488, 0
    %v502 = vsel %vm96, %v489, 0
    %v505 = vsel %vm96, %v490, 0
    %507 = vmatprep.subr.bf16.mxu0 0
    %508 = vmatpush1.bf16.msra.mxu0 0
    %509 = vmatprep.subr.bf16.mxu0 0
    %510 = vmatpush1.bf16.msra.mxu0 0
    %511 = vmatprep.subr.bf16.mxu0 0
    %512 = vmatpush1.bf16.msra.mxu0 0
    %513 = vmatprep.subr.bf16.mxu0 0
    %514 = vmatpush1.bf16.msra.mxu0 0
    %515 = vmatprep.subr.bf16.mxu0 0
    %516 = vmatpush1.bf16.msra.mxu0 0
    %517 = vmatprep.subr.bf16.mxu0 0
    %518 = vmatpush1.bf16.msra.mxu0 0
    %519 = vmatprep.subr.bf16.mxu0 0
    %520 = vmatpush1.bf16.msra.mxu0 0
    %521 = vmatprep.subr.bf16.mxu0 %v499
    %522 = vmatpush1.bf16.msra.mxu0 %v496
    %523 = vmatprep.subr.bf16.mxu0 0
    %524 = vmatpush2.bf16.msra.mxu0 0
    %525 = vmatprep.subr.bf16.mxu0 0
    %526 = vmatpush2.bf16.msra.mxu0 0
    %527 = vmatprep.subr.bf16.mxu0 0
    %528 = vmatpush2.bf16.msra.mxu0 0
    %529 = vmatprep.subr.bf16.mxu0 0
    %530 = vmatpush2.bf16.msra.mxu0 0
    %531 = vmatprep.subr.bf16.mxu0 0
    %532 = vmatpush2.bf16.msra.mxu0 0
    %533 = vmatprep.subr.bf16.mxu0 0
    %534 = vmatpush2.bf16.msra.mxu0 0
    %535 = vmatprep.subr.bf16.mxu0 0
    %536 = vmatpush2.bf16.msra.mxu0 0
    %537 = vmatprep.subr.bf16.mxu0 0
    %538 = vmatpush2.bf16.msra.mxu0 0
    %539 = vmatprep.mubr.bf16.mxu0 0
    %540 = vmatmul.mubr.bf16.gmra.mxu0 %v493
    %v541 = vpop.f32.mrf.mxu0
    %v542 = vadd.f32 0.0, %v541
    %v543 = vpop.f32.mrf.mxu0
    %v544 = vadd.f32 0.0, %v543
    %v545 = vpop.f32.mrf.mxu0
    %v546 = vpop.f32.mrf.mxu0
    %547 = vdwg.mxu0
    %548 = vmatprep.subr.bf16.mxu0 0
    %549 = vmatpush1.bf16.msra.mxu0 0
    %550 = vmatprep.subr.bf16.mxu0 0
    %551 = vmatpush1.bf16.msra.mxu0 0
    %552 = vmatprep.subr.bf16.mxu0 0
    %553 = vmatpush1.bf16.msra.mxu0 0
    %554 = vmatprep.subr.bf16.mxu0 0
    %555 = vmatpush1.bf16.msra.mxu0 0
    %556 = vmatprep.subr.bf16.mxu0 0
    %557 = vmatpush1.bf16.msra.mxu0 0
    %558 = vmatprep.subr.bf16.mxu0 0
    %559 = vmatpush1.bf16.msra.mxu0 0
    %560 = vmatprep.subr.bf16.mxu0 0
    %561 = vmatpush1.bf16.msra.mxu0 0
    %562 = vmatprep.subr.bf16.mxu0 %v505
    %563 = vmatpush1.bf16.msra.mxu0 %v502
    %564 = vmatprep.subr.bf16.mxu0 0
    %565 = vmatpush2.bf16.msra.mxu0 0
    %566 = vmatprep.subr.bf16.mxu0 0
    %567 = vmatpush2.bf16.msra.mxu0 0
    %568 = vmatprep.subr.bf16.mxu0 0
    %569 = vmatpush2.bf16.msra.mxu0 0
    %570 = vmatprep.subr.bf16.mxu0 0
    %571 = vmatpush2.bf16.msra.mxu0 0
    %572 = vmatprep.subr.bf16.mxu0 0
    %573 = vmatpush2.bf16.msra.mxu0 0
    %574 = vmatprep.subr.bf16.mxu0 0
    %575 = vmatpush2.bf16.msra.mxu0 0
    %576 = vmatprep.subr.bf16.mxu0 0
    %577 = vmatpush2.bf16.msra.mxu0 0
    %578 = vmatprep.subr.bf16.mxu0 0
    %579 = vmatpush2.bf16.msra.mxu0 0
    %580 = vmatprep.mubr.bf16.mxu0 0
    %581 = vmatmul.mubr.bf16.gmra.mxu0 %v493
    %v582 = vpop.f32.mrf.mxu0
    %v583 = vadd.f32 0.0, %v582
    %v584 = vpop.f32.mrf.mxu0
    %v585 = vadd.f32 0.0, %v584
    %v586 = vpop.f32.mrf.mxu0
    %v587 = vpop.f32.mrf.mxu0
    %588 = vdwg.mxu0
    %vm589 = vcmp.ge.s32.totalorder %v58, 1
    %vm590 = vcmp.ge.s32.totalorder %v59, 1
    %vm591 = vcmp.ge.s32.totalorder %v60, 1
    %vm592 = vcmp.ge.s32.totalorder %v61, 1
    %v593 = vsel %vm589, 1, 0
    %v594 = vsel %vm590, 1, 0
    %v595 = vsel %vm591, 1, 0
    %v596 = vsel %vm592, 1, 0
    %vm597 = vcmp.eq.s32.totalorder %v593, 1
    %vm598 = vcmp.eq.s32.totalorder %v594, 1
    %vm599 = vcmp.eq.s32.totalorder %v595, 1
    %vm600 = vcmp.eq.s32.totalorder %v596, 1
    %v601 = vsel %vm597, %v542, 0.0
    %v602 = vsel %vm598, %v544, 0.0
    %v603 = vsel %vm599, %v583, 0.0
    %v604 = vsel %vm600, %v585, 0.0
    %v606 = vsel %vm92, %v469, 0
    %v609 = vsel %vm96, %v470, 0
    %v612 = vsel %vm96, %v471, 0
    %v615 = vsel %vm96, %v472, 0
    %v618 = vsel %vm96, %v473, 0
    %620 = vmatprep.subr.bf16.mxu0 0
    %621 = vmatpush1.bf16.msra.mxu0 0
    %622 = vmatprep.subr.bf16.mxu0 0
    %623 = vmatpush1.bf16.msra.mxu0 0
    %624 = vmatprep.subr.bf16.mxu0 0
    %625 = vmatpush1.bf16.msra.mxu0 0
    %626 = vmatprep.subr.bf16.mxu0 0
    %627 = vmatpush1.bf16.msra.mxu0 0
    %628 = vmatprep.subr.bf16.mxu0 0
    %629 = vmatpush1.bf16.msra.mxu0 0
    %630 = vmatprep.subr.bf16.mxu0 0
    %631 = vmatpush1.bf16.msra.mxu0 0
    %632 = vmatprep.subr.bf16.mxu0 0
    %633 = vmatpush1.bf16.msra.mxu0 0
    %634 = vmatprep.subr.bf16.mxu0 %v612
    %635 = vmatpush1.bf16.msra.mxu0 %v609
    %636 = vmatprep.subr.bf16.mxu0 0
    %637 = vmatpush2.bf16.msra.mxu0 0
    %638 = vmatprep.subr.bf16.mxu0 0
    %639 = vmatpush2.bf16.msra.mxu0 0
    %640 = vmatprep.subr.bf16.mxu0 0
    %641 = vmatpush2.bf16.msra.mxu0 0
    %642 = vmatprep.subr.bf16.mxu0 0
    %643 = vmatpush2.bf16.msra.mxu0 0
    %644 = vmatprep.subr.bf16.mxu0 0
    %645 = vmatpush2.bf16.msra.mxu0 0
    %646 = vmatprep.subr.bf16.mxu0 0
    %647 = vmatpush2.bf16.msra.mxu0 0
    %648 = vmatprep.subr.bf16.mxu0 0
    %649 = vmatpush2.bf16.msra.mxu0 0
    %650 = vmatprep.subr.bf16.mxu0 0
    %651 = vmatpush2.bf16.msra.mxu0 0
    %652 = vmatprep.mubr.bf16.mxu0 0
    %653 = vmatmul.mubr.bf16.gmra.mxu0 %v606
    %v654 = vpop.f32.mrf.mxu0
    %v655 = vadd.f32 %v601, %v654
    %v656 = vpop.f32.mrf.mxu0
    %v657 = vadd.f32 %v602, %v656
    %v658 = vpop.f32.mrf.mxu0
    %v659 = vpop.f32.mrf.mxu0
    %660 = vdwg.mxu0
    %661 = vmatprep.subr.bf16.mxu0 0
    %662 = vmatpush1.bf16.msra.mxu0 0
    %663 = vmatprep.subr.bf16.mxu0 0
    %664 = vmatpush1.bf16.msra.mxu0 0
    %665 = vmatprep.subr.bf16.mxu0 0
    %666 = vmatpush1.bf16.msra.mxu0 0
    %667 = vmatprep.subr.bf16.mxu0 0
    %668 = vmatpush1.bf16.msra.mxu0 0
    %669 = vmatprep.subr.bf16.mxu0 0
    %670 = vmatpush1.bf16.msra.mxu0 0
    %671 = vmatprep.subr.bf16.mxu0 0
    %672 = vmatpush1.bf16.msra.mxu0 0
    %673 = vmatprep.subr.bf16.mxu0 0
    %674 = vmatpush1.bf16.msra.mxu0 0
    %675 = vmatprep.subr.bf16.mxu0 %v618
    %676 = vmatpush1.bf16.msra.mxu0 %v615
    %677 = vmatprep.subr.bf16.mxu0 0
    %678 = vmatpush2.bf16.msra.mxu0 0
    %679 = vmatprep.subr.bf16.mxu0 0
    %680 = vmatpush2.bf16.msra.mxu0 0
    %681 = vmatprep.subr.bf16.mxu0 0
    %682 = vmatpush2.bf16.msra.mxu0 0
    %683 = vmatprep.subr.bf16.mxu0 0
    %684 = vmatpush2.bf16.msra.mxu0 0
    %685 = vmatprep.subr.bf16.mxu0 0
    %686 = vmatpush2.bf16.msra.mxu0 0
    %687 = vmatprep.subr.bf16.mxu0 0
    %688 = vmatpush2.bf16.msra.mxu0 0
    %689 = vmatprep.subr.bf16.mxu0 0
    %690 = vmatpush2.bf16.msra.mxu0 0
    %691 = vmatprep.subr.bf16.mxu0 0
    %692 = vmatpush2.bf16.msra.mxu0 0
    %693 = vmatprep.mubr.bf16.mxu0 0
    %694 = vmatmul.mubr.bf16.gmra.mxu0 %v606
    %v695 = vpop.f32.mrf.mxu0
    %v696 = vadd.f32 %v603, %v695
    %v697 = vpop.f32.mrf.mxu0
    %v698 = vadd.f32 %v604, %v697
    %v699 = vpop.f32.mrf.mxu0
    %v700 = vpop.f32.mrf.mxu0
    %701 = vdwg.mxu0
    %702 = vrot.lane.b32.xlu0 %v464, 112
    %v703 = vpop.permute.xlu0 %702
    %704 = vrot.lane.b32.xlu0 %v465, 112
    %v705 = vpop.permute.xlu0 %704
    %706 = vrot.lane.b32.xlu0 %v466, 112
    %v707 = vpop.permute.xlu0 %706
    %708 = vrot.lane.b32.xlu0 %v467, 112
    %v709 = vpop.permute.xlu0 %708
    %vm710 = vcmp.lt.s32.totalorder %v46, 112
    %v711 = vsel %vm710, %v707, %v709
    %v712 = vsel %vm710, %v705, %v707
    %v713 = vsel %vm710, %v703, %v705
    %v714 = vsel %vm710, %v709, %v703
    %v715 = vpack.c.bf16 %v713, %v713
    %v716 = vpack.c.bf16 %v712, %v712
    %v717 = vpack.c.bf16 %v711, %v711
    %v718 = vpack.c.bf16 %v714, %v714
    %s719 = scalar_lea.vmem %s3, 4
    %v720 = vld [vmem:[%s719] sm:$0x3]
    %v722 = vsel %vm92, %v720, 0
    %v725 = vsel %vm96, %v715, 0
    %v728 = vsel %vm96, %v716, 0
    %v731 = vsel %vm96, %v717, 0
    %v734 = vsel %vm96, %v718, 0
    %736 = vmatprep.subr.bf16.mxu0 0
    %737 = vmatpush1.bf16.msra.mxu0 0
    %738 = vmatprep.subr.bf16.mxu0 0
    %739 = vmatpush1.bf16.msra.mxu0 0
    %740 = vmatprep.subr.bf16.mxu0 0
    %741 = vmatpush1.bf16.msra.mxu0 0
    %742 = vmatprep.subr.bf16.mxu0 0
    %743 = vmatpush1.bf16.msra.mxu0 0
    %744 = vmatprep.subr.bf16.mxu0 0
    %745 = vmatpush1.bf16.msra.mxu0 0
    %746 = vmatprep.subr.bf16.mxu0 0
    %747 = vmatpush1.bf16.msra.mxu0 0
    %748 = vmatprep.subr.bf16.mxu0 0
    %749 = vmatpush1.bf16.msra.mxu0 0
    %750 = vmatprep.subr.bf16.mxu0 %v728
    %751 = vmatpush1.bf16.msra.mxu0 %v725
    %752 = vmatprep.subr.bf16.mxu0 0
    %753 = vmatpush2.bf16.msra.mxu0 0
    %754 = vmatprep.subr.bf16.mxu0 0
    %755 = vmatpush2.bf16.msra.mxu0 0
    %756 = vmatprep.subr.bf16.mxu0 0
    %757 = vmatpush2.bf16.msra.mxu0 0
    %758 = vmatprep.subr.bf16.mxu0 0
    %759 = vmatpush2.bf16.msra.mxu0 0
    %760 = vmatprep.subr.bf16.mxu0 0
    %761 = vmatpush2.bf16.msra.mxu0 0
    %762 = vmatprep.subr.bf16.mxu0 0
    %763 = vmatpush2.bf16.msra.mxu0 0
    %764 = vmatprep.subr.bf16.mxu0 0
    %765 = vmatpush2.bf16.msra.mxu0 0
    %766 = vmatprep.subr.bf16.mxu0 0
    %767 = vmatpush2.bf16.msra.mxu0 0
    %768 = vmatprep.mubr.bf16.mxu0 0
    %769 = vmatmul.mubr.bf16.gmra.mxu0 %v722
    %v770 = vpop.f32.mrf.mxu0
    %v771 = vadd.f32 0.0, %v770
    %v772 = vpop.f32.mrf.mxu0
    %v773 = vadd.f32 0.0, %v772
    %v774 = vpop.f32.mrf.mxu0
    %v775 = vpop.f32.mrf.mxu0
    %776 = vdwg.mxu0
    %777 = vmatprep.subr.bf16.mxu0 0
    %778 = vmatpush1.bf16.msra.mxu0 0
    %779 = vmatprep.subr.bf16.mxu0 0
    %780 = vmatpush1.bf16.msra.mxu0 0
    %781 = vmatprep.subr.bf16.mxu0 0
    %782 = vmatpush1.bf16.msra.mxu0 0
    %783 = vmatprep.subr.bf16.mxu0 0
    %784 = vmatpush1.bf16.msra.mxu0 0
    %785 = vmatprep.subr.bf16.mxu0 0
    %786 = vmatpush1.bf16.msra.mxu0 0
    %787 = vmatprep.subr.bf16.mxu0 0
    %788 = vmatpush1.bf16.msra.mxu0 0
    %789 = vmatprep.subr.bf16.mxu0 0
    %790 = vmatpush1.bf16.msra.mxu0 0
    %791 = vmatprep.subr.bf16.mxu0 %v734
    %792 = vmatpush1.bf16.msra.mxu0 %v731
    %793 = vmatprep.subr.bf16.mxu0 0
    %794 = vmatpush2.bf16.msra.mxu0 0
    %795 = vmatprep.subr.bf16.mxu0 0
    %796 = vmatpush2.bf16.msra.mxu0 0
    %797 = vmatprep.subr.bf16.mxu0 0
    %798 = vmatpush2.bf16.msra.mxu0 0
    %799 = vmatprep.subr.bf16.mxu0 0
    %800 = vmatpush2.bf16.msra.mxu0 0
    %801 = vmatprep.subr.bf16.mxu0 0
    %802 = vmatpush2.bf16.msra.mxu0 0
    %803 = vmatprep.subr.bf16.mxu0 0
    %804 = vmatpush2.bf16.msra.mxu0 0
    %805 = vmatprep.subr.bf16.mxu0 0
    %806 = vmatpush2.bf16.msra.mxu0 0
    %807 = vmatprep.subr.bf16.mxu0 0
    %808 = vmatpush2.bf16.msra.mxu0 0
    %809 = vmatprep.mubr.bf16.mxu0 0
    %810 = vmatmul.mubr.bf16.gmra.mxu0 %v722
    %v811 = vpop.f32.mrf.mxu0
    %v812 = vadd.f32 0.0, %v811
    %v813 = vpop.f32.mrf.mxu0
    %v814 = vadd.f32 0.0, %v813
    %v815 = vpop.f32.mrf.mxu0
    %v816 = vpop.f32.mrf.mxu0
    %817 = vdwg.mxu0
    %vm818 = vcmp.lt.s32.totalorder %v58, 15
    %vm819 = vcmp.lt.s32.totalorder %v59, 15
    %vm820 = vcmp.lt.s32.totalorder %v60, 15
    %vm821 = vcmp.lt.s32.totalorder %v61, 15
    %v822 = vsel %vm818, 1, 0
    %v823 = vsel %vm819, 1, 0
    %v824 = vsel %vm820, 1, 0
    %v825 = vsel %vm821, 1, 0
    %vm826 = vcmp.eq.s32.totalorder %v822, 1
    %vm827 = vcmp.eq.s32.totalorder %v823, 1
    %vm828 = vcmp.eq.s32.totalorder %v824, 1
    %vm829 = vcmp.eq.s32.totalorder %v825, 1
    %v830 = vsel %vm826, %v771, 0.0
    %v831 = vsel %vm827, %v773, 0.0
    %v832 = vsel %vm828, %v812, 0.0
    %v833 = vsel %vm829, %v814, 0.0
    %v834 = vadd.f32 %v655, %v830
    %v835 = vadd.f32 %v657, %v831
    %v836 = vadd.f32 %v696, %v832
    %v837 = vadd.f32 %v698, %v833
    %v838 = vld [vmem:[%s4] sm:$0xf]
    %840 = vset.pattern.permute.xlu0 0
    %841 = vperm.xlu0 %840, %v838
    %v842 = vpop.permute.xlu0 %841
    %v844 = vadd.f32 %v834, %v842
    %v845 = vadd.f32 %v835, %v842
    %v846 = vadd.f32 %v836, %v842
    %v847 = vadd.f32 %v837, %v842
    %v848 = vld [vmem:[%s5] sm:$0x3]
    %v850 = vsel %vm92, %v848, 0
    %852 = vmatprep.subr.bf16.mxu0 0
    %853 = vmatpush1.bf16.msra.mxu0 0
    %854 = vmatprep.subr.bf16.mxu0 0
    %855 = vmatpush1.bf16.msra.mxu0 0
    %856 = vmatprep.subr.bf16.mxu0 0
    %857 = vmatpush1.bf16.msra.mxu0 0
    %858 = vmatprep.subr.bf16.mxu0 0
    %859 = vmatpush1.bf16.msra.mxu0 0
    %860 = vmatprep.subr.bf16.mxu0 0
    %861 = vmatpush1.bf16.msra.mxu0 0
    %862 = vmatprep.subr.bf16.mxu0 0
    %863 = vmatpush1.bf16.msra.mxu0 0
    %864 = vmatprep.subr.bf16.mxu0 0
    %865 = vmatpush1.bf16.msra.mxu0 0
    %866 = vmatprep.subr.bf16.mxu0 %v232
    %867 = vmatpush1.bf16.msra.mxu0 %v229
    %868 = vmatprep.subr.bf16.mxu0 0
    %869 = vmatpush2.bf16.msra.mxu0 0
    %870 = vmatprep.subr.bf16.mxu0 0
    %871 = vmatpush2.bf16.msra.mxu0 0
    %872 = vmatprep.subr.bf16.mxu0 0
    %873 = vmatpush2.bf16.msra.mxu0 0
    %874 = vmatprep.subr.bf16.mxu0 0
    %875 = vmatpush2.bf16.msra.mxu0 0
    %876 = vmatprep.subr.bf16.mxu0 0
    %877 = vmatpush2.bf16.msra.mxu0 0
    %878 = vmatprep.subr.bf16.mxu0 0
    %879 = vmatpush2.bf16.msra.mxu0 0
    %880 = vmatprep.subr.bf16.mxu0 0
    %881 = vmatpush2.bf16.msra.mxu0 0
    %882 = vmatprep.subr.bf16.mxu0 0
    %883 = vmatpush2.bf16.msra.mxu0 0
    %884 = vmatprep.mubr.bf16.mxu0 0
    %885 = vmatmul.mubr.bf16.gmra.mxu0 %v850
    %v886 = vpop.f32.mrf.mxu0
    %v887 = vadd.f32 0.0, %v886
    %v888 = vpop.f32.mrf.mxu0
    %v889 = vadd.f32 0.0, %v888
    %v890 = vpop.f32.mrf.mxu0
    %v891 = vpop.f32.mrf.mxu0
    %892 = vdwg.mxu0
    %893 = vmatprep.subr.bf16.mxu0 0
    %894 = vmatpush1.bf16.msra.mxu0 0
    %895 = vmatprep.subr.bf16.mxu0 0
    %896 = vmatpush1.bf16.msra.mxu0 0
    %897 = vmatprep.subr.bf16.mxu0 0
    %898 = vmatpush1.bf16.msra.mxu0 0
    %899 = vmatprep.subr.bf16.mxu0 0
    %900 = vmatpush1.bf16.msra.mxu0 0
    %901 = vmatprep.subr.bf16.mxu0 0
    %902 = vmatpush1.bf16.msra.mxu0 0
    %903 = vmatprep.subr.bf16.mxu0 0
    %904 = vmatpush1.bf16.msra.mxu0 0
    %905 = vmatprep.subr.bf16.mxu0 0
    %906 = vmatpush1.bf16.msra.mxu0 0
    %907 = vmatprep.subr.bf16.mxu0 %v238
    %908 = vmatpush1.bf16.msra.mxu0 %v235
    %909 = vmatprep.subr.bf16.mxu0 0
    %910 = vmatpush2.bf16.msra.mxu0 0
    %911 = vmatprep.subr.bf16.mxu0 0
    %912 = vmatpush2.bf16.msra.mxu0 0
    %913 = vmatprep.subr.bf16.mxu0 0
    %914 = vmatpush2.bf16.msra.mxu0 0
    %915 = vmatprep.subr.bf16.mxu0 0
    %916 = vmatpush2.bf16.msra.mxu0 0
    %917 = vmatprep.subr.bf16.mxu0 0
    %918 = vmatpush2.bf16.msra.mxu0 0
    %919 = vmatprep.subr.bf16.mxu0 0
    %920 = vmatpush2.bf16.msra.mxu0 0
    %921 = vmatprep.subr.bf16.mxu0 0
    %922 = vmatpush2.bf16.msra.mxu0 0
    %923 = vmatprep.subr.bf16.mxu0 0
    %924 = vmatpush2.bf16.msra.mxu0 0
    %925 = vmatprep.mubr.bf16.mxu0 0
    %926 = vmatmul.mubr.bf16.gmra.mxu0 %v850
    %v927 = vpop.f32.mrf.mxu0
    %v928 = vadd.f32 0.0, %v927
    %v929 = vpop.f32.mrf.mxu0
    %v930 = vadd.f32 0.0, %v929
    %v931 = vpop.f32.mrf.mxu0
    %v932 = vpop.f32.mrf.mxu0
    %933 = vdwg.mxu0
    %v934 = vld [vmem:[%s6] sm:$0x3]
    %v936 = vsel %vm92, %v934, 0
    %938 = vmatprep.subr.bf16.mxu0 0
    %939 = vmatpush1.bf16.msra.mxu0 0
    %940 = vmatprep.subr.bf16.mxu0 0
    %941 = vmatpush1.bf16.msra.mxu0 0
    %942 = vmatprep.subr.bf16.mxu0 0
    %943 = vmatpush1.bf16.msra.mxu0 0
    %944 = vmatprep.subr.bf16.mxu0 0
    %945 = vmatpush1.bf16.msra.mxu0 0
    %946 = vmatprep.subr.bf16.mxu0 0
    %947 = vmatpush1.bf16.msra.mxu0 0
    %948 = vmatprep.subr.bf16.mxu0 0
    %949 = vmatpush1.bf16.msra.mxu0 0
    %950 = vmatprep.subr.bf16.mxu0 0
    %951 = vmatpush1.bf16.msra.mxu0 0
    %952 = vmatprep.subr.bf16.mxu0 %v232
    %953 = vmatpush1.bf16.msra.mxu0 %v229
    %954 = vmatprep.subr.bf16.mxu0 0
    %955 = vmatpush2.bf16.msra.mxu0 0
    %956 = vmatprep.subr.bf16.mxu0 0
    %957 = vmatpush2.bf16.msra.mxu0 0
    %958 = vmatprep.subr.bf16.mxu0 0
    %959 = vmatpush2.bf16.msra.mxu0 0
    %960 = vmatprep.subr.bf16.mxu0 0
    %961 = vmatpush2.bf16.msra.mxu0 0
    %962 = vmatprep.subr.bf16.mxu0 0
    %963 = vmatpush2.bf16.msra.mxu0 0
    %964 = vmatprep.subr.bf16.mxu0 0
    %965 = vmatpush2.bf16.msra.mxu0 0
    %966 = vmatprep.subr.bf16.mxu0 0
    %967 = vmatpush2.bf16.msra.mxu0 0
    %968 = vmatprep.subr.bf16.mxu0 0
    %969 = vmatpush2.bf16.msra.mxu0 0
    %970 = vmatprep.mubr.bf16.mxu0 0
    %971 = vmatmul.mubr.bf16.gmra.mxu0 %v936
    %v972 = vpop.f32.mrf.mxu0
    %v973 = vadd.f32 0.0, %v972
    %v974 = vpop.f32.mrf.mxu0
    %v975 = vadd.f32 0.0, %v974
    %v976 = vpop.f32.mrf.mxu0
    %v977 = vpop.f32.mrf.mxu0
    %978 = vdwg.mxu0
    %979 = vmatprep.subr.bf16.mxu0 0
    %980 = vmatpush1.bf16.msra.mxu0 0
    %981 = vmatprep.subr.bf16.mxu0 0
    %982 = vmatpush1.bf16.msra.mxu0 0
    %983 = vmatprep.subr.bf16.mxu0 0
    %984 = vmatpush1.bf16.msra.mxu0 0
    %985 = vmatprep.subr.bf16.mxu0 0
    %986 = vmatpush1.bf16.msra.mxu0 0
    %987 = vmatprep.subr.bf16.mxu0 0
    %988 = vmatpush1.bf16.msra.mxu0 0
    %989 = vmatprep.subr.bf16.mxu0 0
    %990 = vmatpush1.bf16.msra.mxu0 0
    %991 = vmatprep.subr.bf16.mxu0 0
    %992 = vmatpush1.bf16.msra.mxu0 0
    %993 = vmatprep.subr.bf16.mxu0 %v238
    %994 = vmatpush1.bf16.msra.mxu0 %v235
    %995 = vmatprep.subr.bf16.mxu0 0
    %996 = vmatpush2.bf16.msra.mxu0 0
    %997 = vmatprep.subr.bf16.mxu0 0
    %998 = vmatpush2.bf16.msra.mxu0 0
    %999 = vmatprep.subr.bf16.mxu0 0
    %1000 = vmatpush2.bf16.msra.mxu0 0
    %1001 = vmatprep.subr.bf16.mxu0 0
    %1002 = vmatpush2.bf16.msra.mxu0 0
    %1003 = vmatprep.subr.bf16.mxu0 0
    %1004 = vmatpush2.bf16.msra.mxu0 0
    %1005 = vmatprep.subr.bf16.mxu0 0
    %1006 = vmatpush2.bf16.msra.mxu0 0
    %1007 = vmatprep.subr.bf16.mxu0 0
    %1008 = vmatpush2.bf16.msra.mxu0 0
    %1009 = vmatprep.subr.bf16.mxu0 0
    %1010 = vmatpush2.bf16.msra.mxu0 0
    %1011 = vmatprep.mubr.bf16.mxu0 0
    %1012 = vmatmul.mubr.bf16.gmra.mxu0 %v936
    %v1013 = vpop.f32.mrf.mxu0
    %v1014 = vadd.f32 0.0, %v1013
    %v1015 = vpop.f32.mrf.mxu0
    %v1016 = vadd.f32 0.0, %v1015
    %v1017 = vpop.f32.mrf.mxu0
    %v1018 = vpop.f32.mrf.mxu0
    %1019 = vdwg.mxu0
    %vm1020 = vcmp.eq.s32.totalorder %v62, 0
    %vm1021 = vcmp.eq.s32.totalorder %v63, 0
    %vm1022 = vcmp.eq.s32.totalorder %v64, 0
    %vm1023 = vcmp.eq.s32.totalorder %v65, 0
    %v1024 = vsel %vm1020, 1, 0
    %v1025 = vsel %vm1021, 1, 0
    %v1026 = vsel %vm1022, 1, 0
    %v1027 = vsel %vm1023, 1, 0
    %vm1028 = vcmp.eq.s32.totalorder %v1024, 1
    %vm1029 = vcmp.eq.s32.totalorder %v1025, 1
    %vm1030 = vcmp.eq.s32.totalorder %v1026, 1
    %vm1031 = vcmp.eq.s32.totalorder %v1027, 1
    %v1032 = vsel %vm1028, %v43, 0.0
    %v1033 = vsel %vm1029, %v70, 0.0
    %v1034 = vsel %vm1030, %v44, 0.0
    %v1035 = vsel %vm1031, %v71, 0.0
    %vm1036 = vcmask 1043456
    %v1037 = vsel %vm1036, %v1032, 0.0
    %v1038 = vsel %vm1036, %v1033, 0.0
    %v1039 = vadd.f32 %v1037, %v1038
    %v1040 = vsel %vm1036, %v1034, 0.0
    %v1041 = vadd.f32 %v1039, %v1040
    %v1042 = vsel %vm1036, %v1035, 0.0
    %v1043 = vadd.f32 %v1041, %v1042
    %1044 = vadd.xlane.f32.xlu0 %v1043
    %v1045 = vpop.xlane.xlu0 %1044
    %v1046 = vmul.f32 %v1045, 0.00390625
    %v1047 = vld [vmem:[%s7] sm:$0x1]
    %v1048 = vld [vmem:[#allocation2] sm:$0x1]
    %v1050 = vsel %vm92, %v1047, 0
    %v1053 = vsel %vm1036, %v1046, 0
    %1055 = vmatprep.subr.mxu0 0.0
    %1056 = vmatpush1.msra.mxu0 0.0
    %1057 = vmatprep.subr.mxu0 0.0
    %1058 = vmatpush1.msra.mxu0 0.0
    %1059 = vmatprep.subr.mxu0 0.0
    %1060 = vmatpush1.msra.mxu0 0.0
    %1061 = vmatprep.subr.mxu0 0.0
    %1062 = vmatpush1.msra.mxu0 0.0
    %1063 = vmatprep.subr.mxu0 0.0
    %1064 = vmatpush1.msra.mxu0 0.0
    %1065 = vmatprep.subr.mxu0 0.0
    %1066 = vmatpush1.msra.mxu0 0.0
    %1067 = vmatprep.subr.mxu0 0.0
    %1068 = vmatpush1.msra.mxu0 0.0
    %1069 = vmatprep.subr.mxu0 0.0
    %1070 = vmatpush1.msra.mxu0 0.0
    %1071 = vmatprep.subr.mxu0 0.0
    %1072 = vmatpush1.msra.mxu0 0.0
    %1073 = vmatprep.subr.mxu0 0.0
    %1074 = vmatpush1.msra.mxu0 0.0
    %1075 = vmatprep.subr.mxu0 0.0
    %1076 = vmatpush1.msra.mxu0 0.0
    %1077 = vmatprep.subr.mxu0 0.0
    %1078 = vmatpush1.msra.mxu0 0.0
    %1079 = vmatprep.subr.mxu0 0.0
    %1080 = vmatpush1.msra.mxu0 0.0
    %1081 = vmatprep.subr.mxu0 0.0
    %1082 = vmatpush1.msra.mxu0 0.0
    %1083 = vmatprep.subr.mxu0 0.0
    %1084 = vmatpush1.msra.mxu0 0.0
    %1085 = vmatprep.subr.mxu0 0.0
    %1086 = vmatpush1.msra.mxu0 %v1053
    %1087 = vmatprep.subr.mxu0 0.0
    %1088 = vmatpush2.msra.mxu0 0.0
    %1089 = vmatprep.subr.mxu0 0.0
    %1090 = vmatpush2.msra.mxu0 0.0
    %1091 = vmatprep.subr.mxu0 0.0
    %1092 = vmatpush2.msra.mxu0 0.0
    %1093 = vmatprep.subr.mxu0 0.0
    %1094 = vmatpush2.msra.mxu0 0.0
    %1095 = vmatprep.subr.mxu0 0.0
    %1096 = vmatpush2.msra.mxu0 0.0
    %1097 = vmatprep.subr.mxu0 0.0
    %1098 = vmatpush2.msra.mxu0 0.0
    %1099 = vmatprep.subr.mxu0 0.0
    %1100 = vmatpush2.msra.mxu0 0.0
    %1101 = vmatprep.subr.mxu0 0.0
    %1102 = vmatpush2.msra.mxu0 0.0
    %1103 = vmatprep.subr.mxu0 0.0
    %1104 = vmatpush2.msra.mxu0 0.0
    %1105 = vmatprep.subr.mxu0 0.0
    %1106 = vmatpush2.msra.mxu0 0.0
    %1107 = vmatprep.subr.mxu0 0.0
    %1108 = vmatpush2.msra.mxu0 0.0
    %1109 = vmatprep.subr.mxu0 0.0
    %1110 = vmatpush2.msra.mxu0 0.0
    %1111 = vmatprep.subr.mxu0 0.0
    %1112 = vmatpush2.msra.mxu0 0.0
    %1113 = vmatprep.subr.mxu0 0.0
    %1114 = vmatpush2.msra.mxu0 0.0
    %1115 = vmatprep.subr.mxu0 0.0
    %1116 = vmatpush2.msra.mxu0 0.0
    %1117 = vmatprep.subr.mxu0 0.0
    %1118 = vmatpush2.msra.mxu0 0.0
    %1119 = vmatprep.mubr.f32.mxu0 0.0
    %1120 = vmatmul.mubr.f32.gmra.mxu0 %v1050
    %v1121 = vpop.f32.mrf.mxu0
    %v1122 = vadd.f32 %v1048, %v1121
    %v1123 = vpop.f32.mrf.mxu0
    %1124 = vdwg.mxu0
    %v1125 = vmax.f32 %v1122, 0.0
    %v1126 = vld [vmem:[%s9] sm:$0xf]
    %v1127 = vld [vmem:[%s10] sm:$0xf]
    %vm1128 = vcmask 7168
    %v1130 = vsel %vm1128, %v1126, 0
    %vm1132 = vcmask 1040384
    %v1134 = vsel %vm1132, %v1125, 0
    %1136 = vmatprep.subr.mxu0 0.0
    %1137 = vmatpush1.msra.mxu0 0.0
    %1138 = vmatprep.subr.mxu0 0.0
    %1139 = vmatpush1.msra.mxu0 0.0
    %1140 = vmatprep.subr.mxu0 0.0
    %1141 = vmatpush1.msra.mxu0 0.0
    %1142 = vmatprep.subr.mxu0 0.0
    %1143 = vmatpush1.msra.mxu0 0.0
    %1144 = vmatprep.subr.mxu0 0.0
    %1145 = vmatpush1.msra.mxu0 0.0
    %1146 = vmatprep.subr.mxu0 0.0
    %1147 = vmatpush1.msra.mxu0 0.0
    %1148 = vmatprep.subr.mxu0 0.0
    %1149 = vmatpush1.msra.mxu0 0.0
    %1150 = vmatprep.subr.mxu0 0.0
    %1151 = vmatpush1.msra.mxu0 0.0
    %1152 = vmatprep.subr.mxu0 0.0
    %1153 = vmatpush1.msra.mxu0 0.0
    %1154 = vmatprep.subr.mxu0 0.0
    %1155 = vmatpush1.msra.mxu0 0.0
    %1156 = vmatprep.subr.mxu0 0.0
    %1157 = vmatpush1.msra.mxu0 0.0
    %1158 = vmatprep.subr.mxu0 0.0
    %1159 = vmatpush1.msra.mxu0 0.0
    %1160 = vmatprep.subr.mxu0 0.0
    %1161 = vmatpush1.msra.mxu0 0.0
    %1162 = vmatprep.subr.mxu0 0.0
    %1163 = vmatpush1.msra.mxu0 0.0
    %1164 = vmatprep.subr.mxu0 0.0
    %1165 = vmatpush1.msra.mxu0 0.0
    %1166 = vmatprep.subr.mxu0 0.0
    %1167 = vmatpush1.msra.mxu0 %v1134
    %1168 = vmatprep.subr.mxu0 0.0
    %1169 = vmatpush2.msra.mxu0 0.0
    %1170 = vmatprep.subr.mxu0 0.0
    %1171 = vmatpush2.msra.mxu0 0.0
    %1172 = vmatprep.subr.mxu0 0.0
    %1173 = vmatpush2.msra.mxu0 0.0
    %1174 = vmatprep.subr.mxu0 0.0
    %1175 = vmatpush2.msra.mxu0 0.0
    %1176 = vmatprep.subr.mxu0 0.0
    %1177 = vmatpush2.msra.mxu0 0.0
    %1178 = vmatprep.subr.mxu0 0.0
    %1179 = vmatpush2.msra.mxu0 0.0
    %1180 = vmatprep.subr.mxu0 0.0
    %1181 = vmatpush2.msra.mxu0 0.0
    %1182 = vmatprep.subr.mxu0 0.0
    %1183 = vmatpush2.msra.mxu0 0.0
    %1184 = vmatprep.subr.mxu0 0.0
    %1185 = vmatpush2.msra.mxu0 0.0
    %1186 = vmatprep.subr.mxu0 0.0
    %1187 = vmatpush2.msra.mxu0 0.0
    %1188 = vmatprep.subr.mxu0 0.0
    %1189 = vmatpush2.msra.mxu0 0.0
    %1190 = vmatprep.subr.mxu0 0.0
    %1191 = vmatpush2.msra.mxu0 0.0
    %1192 = vmatprep.subr.mxu0 0.0
    %1193 = vmatpush2.msra.mxu0 0.0
    %1194 = vmatprep.subr.mxu0 0.0
    %1195 = vmatpush2.msra.mxu0 0.0
    %1196 = vmatprep.subr.mxu0 0.0
    %1197 = vmatpush2.msra.mxu0 0.0
    %1198 = vmatprep.subr.mxu0 0.0
    %1199 = vmatpush2.msra.mxu0 0.0
    %1200 = vmatprep.mubr.f32.mxu0 0.0
    %1201 = vmatmul.mubr.f32.gmra.mxu0 %v1130
    %v1202 = vpop.f32.mrf.mxu0
    %v1203 = vadd.f32 %v1127, %v1202
    %v1204 = vpop.f32.mrf.mxu0
    %1205 = vdwg.mxu0
    %v1206 = vxor.u32 %v1203, 2147483648
    %v1207 = vmul.f32 %v1206, 1.442695
    %v1208 = vpow.pop %v1207
    %v1209 = vadd.f32 %v1208, 1.0
    %v1210 = vrcp.pop %v1209
    %v1211 = vmul.f32 1.0, %v1210
    %1213 = vset.pattern.permute.xlu0 0
    %1214 = vperm.xlu0 %1213, %v1211
    %v1215 = vpop.permute.xlu0 %1214
    %v1217 = vsel %vm1028, %v1215, 0.0
    %v1218 = vsel %vm1029, %v1215, 0.0
    %v1219 = vsel %vm1030, %v1215, 0.0
    %v1220 = vsel %vm1031, %v1215, 0.0
    %v1221 = vadd.f32 %v1217, 0.0
    %v1222 = vadd.f32 %v1218, 0.0
    %v1223 = vadd.f32 %v1219, 0.0
    %v1224 = vadd.f32 %v1220, 0.0
    %vm1225 = vcmp.eq.s32.totalorder %v62, 1
    %vm1226 = vcmp.eq.s32.totalorder %v63, 1
    %vm1227 = vcmp.eq.s32.totalorder %v64, 1
    %vm1228 = vcmp.eq.s32.totalorder %v65, 1
    %v1229 = vsel %vm1225, 1, 0
    %v1230 = vsel %vm1226, 1, 0
    %v1231 = vsel %vm1227, 1, 0
    %v1232 = vsel %vm1228, 1, 0
    %vm1233 = vcmp.eq.s32.totalorder %v1229, 1
    %vm1234 = vcmp.eq.s32.totalorder %v1230, 1
    %vm1235 = vcmp.eq.s32.totalorder %v1231, 1
    %vm1236 = vcmp.eq.s32.totalorder %v1232, 1
    %v1237 = vsel %vm1233, %v43, 0.0
    %v1238 = vsel %vm1234, %v70, 0.0
    %v1239 = vsel %vm1235, %v44, 0.0
    %v1240 = vsel %vm1236, %v71, 0.0
    %v1241 = vsel %vm1036, %v1237, 0.0
    %v1242 = vsel %vm1036, %v1238, 0.0
    %v1243 = vadd.f32 %v1241, %v1242
    %v1244 = vsel %vm1036, %v1239, 0.0
    %v1245 = vadd.f32 %v1243, %v1244
    %v1246 = vsel %vm1036, %v1240, 0.0
    %v1247 = vadd.f32 %v1245, %v1246
    %1248 = vadd.xlane.f32.xlu0 %v1247
    %v1249 = vpop.xlane.xlu0 %1248
    %v1250 = vmul.f32 %v1249, 0.00390625
    %v1252 = vsel %vm1036, %v1250, 0
    %1254 = vmatprep.subr.mxu0 0.0
    %1255 = vmatpush1.msra.mxu0 0.0
    %1256 = vmatprep.subr.mxu0 0.0
    %1257 = vmatpush1.msra.mxu0 0.0
    %1258 = vmatprep.subr.mxu0 0.0
    %1259 = vmatpush1.msra.mxu0 0.0
    %1260 = vmatprep.subr.mxu0 0.0
    %1261 = vmatpush1.msra.mxu0 0.0
    %1262 = vmatprep.subr.mxu0 0.0
    %1263 = vmatpush1.msra.mxu0 0.0
    %1264 = vmatprep.subr.mxu0 0.0
    %1265 = vmatpush1.msra.mxu0 0.0
    %1266 = vmatprep.subr.mxu0 0.0
    %1267 = vmatpush1.msra.mxu0 0.0
    %1268 = vmatprep.subr.mxu0 0.0
    %1269 = vmatpush1.msra.mxu0 0.0
    %1270 = vmatprep.subr.mxu0 0.0
    %1271 = vmatpush1.msra.mxu0 0.0
    %1272 = vmatprep.subr.mxu0 0.0
    %1273 = vmatpush1.msra.mxu0 0.0
    %1274 = vmatprep.subr.mxu0 0.0
    %1275 = vmatpush1.msra.mxu0 0.0
    %1276 = vmatprep.subr.mxu0 0.0
    %1277 = vmatpush1.msra.mxu0 0.0
    %1278 = vmatprep.subr.mxu0 0.0
    %1279 = vmatpush1.msra.mxu0 0.0
    %1280 = vmatprep.subr.mxu0 0.0
    %1281 = vmatpush1.msra.mxu0 0.0
    %1282 = vmatprep.subr.mxu0 0.0
    %1283 = vmatpush1.msra.mxu0 0.0
    %1284 = vmatprep.subr.mxu0 0.0
    %1285 = vmatpush1.msra.mxu0 %v1252
    %1286 = vmatprep.subr.mxu0 0.0
    %1287 = vmatpush2.msra.mxu0 0.0
    %1288 = vmatprep.subr.mxu0 0.0
    %1289 = vmatpush2.msra.mxu0 0.0
    %1290 = vmatprep.subr.mxu0 0.0
    %1291 = vmatpush2.msra.mxu0 0.0
    %1292 = vmatprep.subr.mxu0 0.0
    %1293 = vmatpush2.msra.mxu0 0.0
    %1294 = vmatprep.subr.mxu0 0.0
    %1295 = vmatpush2.msra.mxu0 0.0
    %1296 = vmatprep.subr.mxu0 0.0
    %1297 = vmatpush2.msra.mxu0 0.0
    %1298 = vmatprep.subr.mxu0 0.0
    %1299 = vmatpush2.msra.mxu0 0.0
    %1300 = vmatprep.subr.mxu0 0.0
    %1301 = vmatpush2.msra.mxu0 0.0
    %1302 = vmatprep.subr.mxu0 0.0
    %1303 = vmatpush2.msra.mxu0 0.0
    %1304 = vmatprep.subr.mxu0 0.0
    %1305 = vmatpush2.msra.mxu0 0.0
    %1306 = vmatprep.subr.mxu0 0.0
    %1307 = vmatpush2.msra.mxu0 0.0
    %1308 = vmatprep.subr.mxu0 0.0
    %1309 = vmatpush2.msra.mxu0 0.0
    %1310 = vmatprep.subr.mxu0 0.0
    %1311 = vmatpush2.msra.mxu0 0.0
    %1312 = vmatprep.subr.mxu0 0.0
    %1313 = vmatpush2.msra.mxu0 0.0
    %1314 = vmatprep.subr.mxu0 0.0
    %1315 = vmatpush2.msra.mxu0 0.0
    %1316 = vmatprep.subr.mxu0 0.0
    %1317 = vmatpush2.msra.mxu0 0.0
    %1318 = vmatprep.mubr.f32.mxu0 0.0
    %1319 = vmatmul.mubr.f32.gmra.mxu0 %v1050
    %v1320 = vpop.f32.mrf.mxu0
    %v1321 = vadd.f32 %v1048, %v1320
    %v1322 = vpop.f32.mrf.mxu0
    %1323 = vdwg.mxu0
    %v1324 = vmax.f32 %v1321, 0.0
    %v1326 = vsel %vm1132, %v1324, 0
    %1328 = vmatprep.subr.mxu0 0.0
    %1329 = vmatpush1.msra.mxu0 0.0
    %1330 = vmatprep.subr.mxu0 0.0
    %1331 = vmatpush1.msra.mxu0 0.0
    %1332 = vmatprep.subr.mxu0 0.0
    %1333 = vmatpush1.msra.mxu0 0.0
    %1334 = vmatprep.subr.mxu0 0.0
    %1335 = vmatpush1.msra.mxu0 0.0
    %1336 = vmatprep.subr.mxu0 0.0
    %1337 = vmatpush1.msra.mxu0 0.0
    %1338 = vmatprep.subr.mxu0 0.0
    %1339 = vmatpush1.msra.mxu0 0.0
    %1340 = vmatprep.subr.mxu0 0.0
    %1341 = vmatpush1.msra.mxu0 0.0
    %1342 = vmatprep.subr.mxu0 0.0
    %1343 = vmatpush1.msra.mxu0 0.0
    %1344 = vmatprep.subr.mxu0 0.0
    %1345 = vmatpush1.msra.mxu0 0.0
    %1346 = vmatprep.subr.mxu0 0.0
    %1347 = vmatpush1.msra.mxu0 0.0
    %1348 = vmatprep.subr.mxu0 0.0
    %1349 = vmatpush1.msra.mxu0 0.0
    %1350 = vmatprep.subr.mxu0 0.0
    %1351 = vmatpush1.msra.mxu0 0.0
    %1352 = vmatprep.subr.mxu0 0.0
    %1353 = vmatpush1.msra.mxu0 0.0
    %1354 = vmatprep.subr.mxu0 0.0
    %1355 = vmatpush1.msra.mxu0 0.0
    %1356 = vmatprep.subr.mxu0 0.0
    %1357 = vmatpush1.msra.mxu0 0.0
    %1358 = vmatprep.subr.mxu0 0.0
    %1359 = vmatpush1.msra.mxu0 %v1326
    %1360 = vmatprep.subr.mxu0 0.0
    %1361 = vmatpush2.msra.mxu0 0.0
    %1362 = vmatprep.subr.mxu0 0.0
    %1363 = vmatpush2.msra.mxu0 0.0
    %1364 = vmatprep.subr.mxu0 0.0
    %1365 = vmatpush2.msra.mxu0 0.0
    %1366 = vmatprep.subr.mxu0 0.0
    %1367 = vmatpush2.msra.mxu0 0.0
    %1368 = vmatprep.subr.mxu0 0.0
    %1369 = vmatpush2.msra.mxu0 0.0
    %1370 = vmatprep.subr.mxu0 0.0
    %1371 = vmatpush2.msra.mxu0 0.0
    %1372 = vmatprep.subr.mxu0 0.0
    %1373 = vmatpush2.msra.mxu0 0.0
    %1374 = vmatprep.subr.mxu0 0.0
    %1375 = vmatpush2.msra.mxu0 0.0
    %1376 = vmatprep.subr.mxu0 0.0
    %1377 = vmatpush2.msra.mxu0 0.0
    %1378 = vmatprep.subr.mxu0 0.0
    %1379 = vmatpush2.msra.mxu0 0.0
    %1380 = vmatprep.subr.mxu0 0.0
    %1381 = vmatpush2.msra.mxu0 0.0
    %1382 = vmatprep.subr.mxu0 0.0
    %1383 = vmatpush2.msra.mxu0 0.0
    %1384 = vmatprep.subr.mxu0 0.0
    %1385 = vmatpush2.msra.mxu0 0.0
    %1386 = vmatprep.subr.mxu0 0.0
    %1387 = vmatpush2.msra.mxu0 0.0
    %1388 = vmatprep.subr.mxu0 0.0
    %1389 = vmatpush2.msra.mxu0 0.0
    %1390 = vmatprep.subr.mxu0 0.0
    %1391 = vmatpush2.msra.mxu0 0.0
    %1392 = vmatprep.mubr.f32.mxu0 0.0
    %1393 = vmatmul.mubr.f32.gmra.mxu0 %v1130
    %v1394 = vpop.f32.mrf.mxu0
    %v1395 = vadd.f32 %v1127, %v1394
    %v1396 = vpop.f32.mrf.mxu0
    %1397 = vdwg.mxu0
    %v1398 = vxor.u32 %v1395, 2147483648
    %v1399 = vmul.f32 %v1398, 1.442695
    %v1400 = vpow.pop %v1399
    %v1401 = vadd.f32 %v1400, 1.0
    %v1402 = vrcp.pop %v1401
    %v1403 = vmul.f32 1.0, %v1402
    %1405 = vset.pattern.permute.xlu0 0
    %1406 = vperm.xlu0 %1405, %v1403
    %v1407 = vpop.permute.xlu0 %1406
    %v1409 = vsel %vm1233, %v1407, 0.0
    %v1410 = vsel %vm1234, %v1407, 0.0
    %v1411 = vsel %vm1235, %v1407, 0.0
    %v1412 = vsel %vm1236, %v1407, 0.0
    %v1413 = vadd.f32 %v1221, %v1409
    %v1414 = vadd.f32 %v1222, %v1410
    %v1415 = vadd.f32 %v1223, %v1411
    %v1416 = vadd.f32 %v1224, %v1412
    %v1417 = vsub.f32 %v887, %v844
    %v1418 = vsub.f32 %v889, %v845
    %v1419 = vsub.f32 %v928, %v846
    %v1420 = vsub.f32 %v930, %v847
    %v1421 = vmul.f32 %v1413, %v973
    %v1422 = vmul.f32 %v1414, %v975
    %v1423 = vmul.f32 %v1415, %v1014
    %v1424 = vmul.f32 %v1416, %v1016
    %v1425 = vadd.f32 %v1417, %v1421
    %v1426 = vadd.f32 %v1418, %v1422
    %v1427 = vadd.f32 %v1419, %v1423
    %v1428 = vadd.f32 %v1420, %v1424
    %v1433 = vcombine.low %v1425, %v1426
    %v1434 = vcombine.low %v1427, %v1428
    %1437 = vst [vmem:[#allocation3] sm:$0xff] %v1433
    %1438 = vst [vmem:[#allocation3 + $0x8] sm:$0xff] %v1434
    // Predicated region
    $region46: #{tpu_custom_call.1} parent=1 // pred_check
      _
    $region47: #{tpu_custom_call.1} parent=1 // pred_check_branch
      %1440 = sbr.rel (0) target = $region49
    $region48: #{tpu_custom_call.1} parent=1 // pred_region
      %s1442 = ssub.s32 256, 256
      %1443 = vsyncadd [#allocation4], %s1442
      %s1445 = sshll.u32 [#allocation3], 4
      %s1446 = int_to_ptr.vmem [resolvable:$true] %s1445
      %1448 = dma.vmem_to_hbm [thread:$0]  %s1446, 256, %s11, [#allocation4]
    $region49: #{tpu_custom_call.1} parent=1 // pred_fallthru
      _
    // Predicated region
    $region50: #{tpu_custom_call.1} parent=1 // pred_check
      _
    $region51: #{tpu_custom_call.1} parent=1 // pred_check_branch
      %1450 = sbr.rel (0) target = $region53
    $region52: #{tpu_custom_call.1} parent=1 // pred_region
      %1451 = dma.done [#allocation4], 256
    $region53: #{tpu_custom_call.1} parent=1 // pred_fallthru
      _
    %1452 = vsyncpa [#allocation4], 1

</llo_original>
